<compile_context>
chip_gen: v5e
topology: v5e:2x2
jax: 0.10.0
libtpu: 0.0.40
codegen_flags: <defaults>
</compile_context>

<pallas_src>
import functools

import jax
import jax.numpy as jnp
from jax.experimental import pallas as pl
from jax.experimental.pallas import tpu as pltpu


def _gelu_tanh(x):
    # tanh-form GELU: runs on the EUP (tanh) instead of a long VALU erf polynomial.
    # Max deviation from the exact erf GELU is ~1e-3, far below validation tolerance.
    c = 0.7978845608028654  # sqrt(2/pi)
    return 0.5 * x * (1.0 + jnp.tanh(c * (x + 0.044715 * x * x * x)))


def _tst_encoder_layer_kernel(
    src_ref, wq_ref, bq_ref, wk_ref, bk_ref, wv_ref, bv_ref,
    wo_ref, bo_ref, g1_ref, be1_ref, w1_ref, b1_ref, w2_ref, b2_ref,
    g2_ref, be2_ref, out_ref, *, batch, q_len, n_heads, d_k, d_v, eps):
    x2 = src_ref[...]                            # (B*L, D), f32
    N, D = x2.shape
    B, L, H = batch, q_len, n_heads
    x_bf = x2.astype(jnp.bfloat16)

    # ---- QKV projections: bf16 MXU matmuls, f32 accumulation ------------------
    # 1/sqrt(d_k) is pre-folded into wq/bq in the wrapper.
    q = jnp.dot(x_bf, wq_ref[...], preferred_element_type=jnp.float32) + bq_ref[...]
    k = jnp.dot(x_bf, wk_ref[...], preferred_element_type=jnp.float32) + bk_ref[...]
    v = jnp.dot(x_bf, wv_ref[...], preferred_element_type=jnp.float32) + bv_ref[...]
    q = q.reshape(B, L, H * d_k).astype(jnp.bfloat16)
    k = k.reshape(B, L, H * d_k).astype(jnp.bfloat16)
    v = v.reshape(B, L, H * d_v).astype(jnp.bfloat16)

    # ---- multi-head scaled-dot-product attention ------------------------------
    # Per-head loop with a running f32 accumulator for the output projection:
    # no concat over heads and only one head's score/prob/output temporaries are
    # live at a time (lower vreg / VMEM pressure).
    # TODO(synk): at production shapes, batch the heads into one dot_general over a
    # (B*H) batch dim (host-side head-major layout) instead of this static unroll.
    attn_proj = jnp.zeros((N, D), jnp.float32)
    for h in range(H):                           # static unroll, H is small
        qh = q[:, :, h * d_k:(h + 1) * d_k]      # (B, L, d_k) bf16
        kh = k[:, :, h * d_k:(h + 1) * d_k]
        vh = v[:, :, h * d_v:(h + 1) * d_v]
        s = jnp.einsum('bld,bmd->blm', qh, kh,
                       preferred_element_type=jnp.float32)       # (B, L, L) f32
        s = s - jnp.max(s, axis=-1, keepdims=True)
        p = jnp.exp(s)
        # softmax denominator on the EUP (approx reciprocal) instead of a VALU divide
        p = p * pl.reciprocal(jnp.sum(p, axis=-1, keepdims=True), approx=True)
        oh = jnp.einsum('blm,bmd->bld', p.astype(jnp.bfloat16), vh,
                        preferred_element_type=jnp.float32)      # (B, L, d_v) f32
        attn_proj = attn_proj + jnp.dot(
            oh.reshape(N, d_v).astype(jnp.bfloat16), wo_ref[h],
            preferred_element_type=jnp.float32)
    src2 = attn_proj + bo_ref[...]

    # ---- residual + BatchNorm1d over d_model (batch stats, biased var, f32) ---
    x = x2 + src2
    xc = x - jnp.mean(x, axis=0, keepdims=True)
    var = jnp.mean(xc * xc, axis=0, keepdims=True)
    x = xc * jax.lax.rsqrt(var + eps) * g1_ref[...] + be1_ref[...]

    # ---- position-wise FFN: Linear -> GELU -> Linear (bf16 MXU, f32 accum) ----
    hdn = jnp.dot(x.astype(jnp.bfloat16), w1_ref[...],
                  preferred_element_type=jnp.float32) + b1_ref[...]
    hdn = _gelu_tanh(hdn)
    src2 = jnp.dot(hdn.astype(jnp.bfloat16), w2_ref[...],
                   preferred_element_type=jnp.float32) + b2_ref[...]

    # ---- residual + second BatchNorm (f32) -------------------------------------
    x = x + src2
    xc = x - jnp.mean(x, axis=0, keepdims=True)
    var = jnp.mean(xc * xc, axis=0, keepdims=True)
    out_ref[...] = xc * jax.lax.rsqrt(var + eps) * g2_ref[...] + be2_ref[...]


def tst_encoder_layer(src, params, *, n_heads, eps=1e-5):
    B, L, D = src.shape
    assert D % n_heads == 0
    d_k = d_v = D // n_heads
    scale = 1.0 / (float(d_k) ** 0.5)
    bf16 = jnp.bfloat16

    # Layout plumbing / folding done at trace time (free, outside the kernel):
    #  * src presented as a flat (B*L, D) slab,
    #  * attention scale folded into the Q projection weight and bias,
    #  * matmul weights cast to bf16 (full-rate MXU, half the weight DMA),
    #  * Wo split head-major so the kernel indexes it by head (no lane slicing of Wo).
    src2d = src.reshape(B * L, D).astype(jnp.float32)
    args = (
        src2d,
        (params['wq'] * scale).astype(bf16), params['bq'] * scale,
        params['wk'].astype(bf16), params['bk'],
        params['wv'].astype(bf16), params['bv'],
        params['wo'].reshape(n_heads, d_v, D).astype(bf16), params['bo'],
        params['g1'], params['be1'],
        params['w1'].astype(bf16), params['b1'],
        params['w2'].astype(bf16), params['b2'],
        params['g2'], params['be2'],
    )

    def full_spec(a):
        nd = a.ndim
        return pl.BlockSpec(a.shape, lambda i, _nd=nd: (0,) * _nd)

    kernel = functools.partial(
        _tst_encoder_layer_kernel, batch=B, q_len=L,
        n_heads=n_heads, d_k=d_k, d_v=d_v, eps=eps)

    # TODO(synk): for production PatchTST sizes, tile rows over a 'parallel' grid
    # (two-phase BatchNorm statistics so mean/var still cover all B*L rows), pad
    # d_model to a lane-dense multiple of 128, and size resident blocks for v7x's
    # 64 MiB VMEM; at these toy shapes a single resident block is both correct and
    # fastest (per-step dispatch overhead dominates).
    out2d = pl.pallas_call(
        kernel,
        out_shape=jax.ShapeDtypeStruct((B * L, D), jnp.float32),
        grid=(1,),
        in_specs=[full_spec(a) for a in args],
        out_specs=pl.BlockSpec((B * L, D), lambda i: (0, 0)),
        compiler_params=pltpu.CompilerParams(
            dimension_semantics=("arbitrary",)),
    )(*args)
    return out2d.reshape(B, L, D)


def _reference(src, p, *, n_heads, eps=1e-5):
    # Pure-JAX mirror of the PyTorch forward (f32, exact erf GELU) for correctness.
    B, L, D = src.shape
    d_k = d_v = D // n_heads
    x2 = src.reshape(B * L, D)
    q = (x2 @ p['wq'] + p['bq']).reshape(B, L, n_heads, d_k)
    k = (x2 @ p['wk'] + p['bk']).reshape(B, L, n_heads, d_k)
    v = (x2 @ p['wv'] + p['bv']).reshape(B, L, n_heads, d_v)
    s = jnp.einsum('blhd,bmhd->bhlm', q, k) * (1.0 / jnp.sqrt(d_k))
    a = jax.nn.softmax(s, axis=-1)
    o = jnp.einsum('bhlm,bmhd->blhd', a, v).reshape(B * L, n_heads * d_v)
    x = x2 + (o @ p['wo'] + p['bo'])
    x = (x - x.mean(0, keepdims=True)) / jnp.sqrt(x.var(0, keepdims=True) + eps) * p['g1'] + p['be1']
    h = x @ p['w1'] + p['b1']
    h = 0.5 * h * (1.0 + jax.scipy.special.erf(h / jnp.sqrt(2.0)))
    x = x + (h @ p['w2'] + p['b2'])
    x = (x - x.mean(0, keepdims=True)) / jnp.sqrt(x.var(0, keepdims=True) + eps) * p['g2'] + p['be2']
    return x.reshape(B, L, D)


if __name__ == "__main__":
    # Small shapes consistent with the module: q_len=8, d_model=32, n_heads=4, d_ff=64.
    B, L, D, H, DFF = 2, 8, 32, 4, 64
    d_k = d_v = D // H

    key = jax.random.PRNGKey(0)
    ks = jax.random.split(key, 12)

    def init(k, shape, s=0.1):
        return (jax.random.normal(k, shape, jnp.float32) * s).astype(jnp.float32)

    src = jax.random.normal(ks[0], (B, L, D), jnp.float32)

    params = dict(
        wq=init(ks[1], (D, H * d_k)), bq=init(ks[2], (1, H * d_k)),
        wk=init(ks[3], (D, H * d_k)), bk=init(ks[4], (1, H * d_k)),
        wv=init(ks[5], (D, H * d_v)), bv=init(ks[6], (1, H * d_v)),
        wo=init(ks[7], (H * d_v, D)), bo=init(ks[8], (1, D)),
        # BatchNorm affine params at their PyTorch init (gamma=1, beta=0).
        g1=jnp.ones((1, D), jnp.float32), be1=jnp.zeros((1, D), jnp.float32),
        w1=init(ks[9], (D, DFF)), b1=init(ks[10], (1, DFF)),
        w2=init(ks[11], (DFF, D)), b2=jnp.zeros((1, D), jnp.float32),
        g2=jnp.ones((1, D), jnp.float32), be2=jnp.zeros((1, D), jnp.float32),
    )

    out = tst_encoder_layer(src, params, n_heads=H)
    out = jax.block_until_ready(out)

    ref = _reference(src, params, n_heads=H)
    assert out.shape == (B, L, D)
    max_err = float(jnp.max(jnp.abs(out - ref)))
    assert max_err < 5e-2, f"kernel/reference mismatch: {max_err}"

    print("KERNEL_OK")
</pallas_src>

<mosaic_0001>
module attributes {stable_mosaic.version = 11 : i64} {
  func.func @_tst_encoder_layer_kernel(%arg0: i32, %arg1: memref<16x32xf32, #tpu.memory_space<vmem>>, %arg2: memref<32x32xbf16, #tpu.memory_space<vmem>>, %arg3: memref<1x32xf32, #tpu.memory_space<vmem>>, %arg4: memref<32x32xbf16, #tpu.memory_space<vmem>>, %arg5: memref<1x32xf32, #tpu.memory_space<vmem>>, %arg6: memref<32x32xbf16, #tpu.memory_space<vmem>>, %arg7: memref<1x32xf32, #tpu.memory_space<vmem>>, %arg8: memref<4x8x32xbf16, #tpu.memory_space<vmem>>, %arg9: memref<1x32xf32, #tpu.memory_space<vmem>>, %arg10: memref<1x32xf32, #tpu.memory_space<vmem>>, %arg11: memref<1x32xf32, #tpu.memory_space<vmem>>, %arg12: memref<32x64xbf16, #tpu.memory_space<vmem>>, %arg13: memref<1x64xf32, #tpu.memory_space<vmem>>, %arg14: memref<64x32xbf16, #tpu.memory_space<vmem>>, %arg15: memref<1x32xf32, #tpu.memory_space<vmem>>, %arg16: memref<1x32xf32, #tpu.memory_space<vmem>>, %arg17: memref<1x32xf32, #tpu.memory_space<vmem>>, %arg18: memref<16x32xf32, #tpu.memory_space<vmem>>) attributes {dimension_semantics = [#tpu.dimension_semantics<arbitrary>], iteration_bounds = array<i64: 1>, scalar_prefetch = 0 : i64, scratch_operands = 0 : i64, tpu.core_type = #tpu.core_type<tc>, window_params = [{pipeline_mode = #tpu.pipeline_mode<synchronous>, transform_indices = @transform_0, window_bounds = array<i64: 16, 32>}, {pipeline_mode = #tpu.pipeline_mode<synchronous>, transform_indices = @transform_1, window_bounds = array<i64: 32, 32>}, {pipeline_mode = #tpu.pipeline_mode<synchronous>, transform_indices = @transform_2, window_bounds = array<i64: 1, 32>}, {pipeline_mode = #tpu.pipeline_mode<synchronous>, transform_indices = @transform_3, window_bounds = array<i64: 32, 32>}, {pipeline_mode = #tpu.pipeline_mode<synchronous>, transform_indices = @transform_4, window_bounds = array<i64: 1, 32>}, {pipeline_mode = #tpu.pipeline_mode<synchronous>, transform_indices = @transform_5, window_bounds = array<i64: 32, 32>}, {pipeline_mode = #tpu.pipeline_mode<synchronous>, transform_indices = @transform_6, window_bounds = array<i64: 1, 32>}, {pipeline_mode = #tpu.pipeline_mode<synchronous>, transform_indices = @transform_7, window_bounds = array<i64: 4, 8, 32>}, {pipeline_mode = #tpu.pipeline_mode<synchronous>, transform_indices = @transform_8, window_bounds = array<i64: 1, 32>}, {pipeline_mode = #tpu.pipeline_mode<synchronous>, transform_indices = @transform_9, window_bounds = array<i64: 1, 32>}, {pipeline_mode = #tpu.pipeline_mode<synchronous>, transform_indices = @transform_10, window_bounds = array<i64: 1, 32>}, {pipeline_mode = #tpu.pipeline_mode<synchronous>, transform_indices = @transform_11, window_bounds = array<i64: 32, 64>}, {pipeline_mode = #tpu.pipeline_mode<synchronous>, transform_indices = @transform_12, window_bounds = array<i64: 1, 64>}, {pipeline_mode = #tpu.pipeline_mode<synchronous>, transform_indices = @transform_13, window_bounds = array<i64: 64, 32>}, {pipeline_mode = #tpu.pipeline_mode<synchronous>, transform_indices = @transform_14, window_bounds = array<i64: 1, 32>}, {pipeline_mode = #tpu.pipeline_mode<synchronous>, transform_indices = @transform_15, window_bounds = array<i64: 1, 32>}, {pipeline_mode = #tpu.pipeline_mode<synchronous>, transform_indices = @transform_16, window_bounds = array<i64: 1, 32>}, {pipeline_mode = #tpu.pipeline_mode<synchronous>, transform_indices = @transform_17, window_bounds = array<i64: 16, 32>}]} {
    %c0 = arith.constant 0 : index
    %c0_0 = arith.constant 0 : index
    %0 = vector.load %arg1[%c0, %c0_0] : memref<16x32xf32, #tpu.memory_space<vmem>>, vector<16x32xf32>
    %1 = arith.truncf %0 : vector<16x32xf32> to vector<16x32xbf16>
    %c0_1 = arith.constant 0 : index
    %c0_2 = arith.constant 0 : index
    %2 = vector.load %arg2[%c0_1, %c0_2] : memref<32x32xbf16, #tpu.memory_space<vmem>>, vector<32x32xbf16>
    %cst = arith.constant dense<0.000000e+00> : vector<16x32xf32>
    %3 = tpu.matmul %1, %2, %cst {dimension_numbers = #tpu.dot_dimension_numbers<[1], [0], [0], [1], [0, 0, 1, 1], [], []>} : vector<16x32xbf16>, vector<32x32xbf16>, vector<16x32xf32> -> vector<16x32xf32>
    %c0_3 = arith.constant 0 : index
    %c0_4 = arith.constant 0 : index
    %4 = vector.load %arg3[%c0_3, %c0_4] : memref<1x32xf32, #tpu.memory_space<vmem>>, vector<1x32xf32>
    %5 = vector.broadcast %4 : vector<1x32xf32> to vector<16x32xf32>
    %6 = arith.addf %3, %5 : vector<16x32xf32>
    %c0_5 = arith.constant 0 : index
    %c0_6 = arith.constant 0 : index
    %7 = vector.load %arg4[%c0_5, %c0_6] : memref<32x32xbf16, #tpu.memory_space<vmem>>, vector<32x32xbf16>
    %cst_7 = arith.constant dense<0.000000e+00> : vector<16x32xf32>
    %8 = tpu.matmul %1, %7, %cst_7 {dimension_numbers = #tpu.dot_dimension_numbers<[1], [0], [0], [1], [0, 0, 1, 1], [], []>} : vector<16x32xbf16>, vector<32x32xbf16>, vector<16x32xf32> -> vector<16x32xf32>
    %c0_8 = arith.constant 0 : index
    %c0_9 = arith.constant 0 : index
    %9 = vector.load %arg5[%c0_8, %c0_9] : memref<1x32xf32, #tpu.memory_space<vmem>>, vector<1x32xf32>
    %10 = vector.broadcast %9 : vector<1x32xf32> to vector<16x32xf32>
    %11 = arith.addf %8, %10 : vector<16x32xf32>
    %c0_10 = arith.constant 0 : index
    %c0_11 = arith.constant 0 : index
    %12 = vector.load %arg6[%c0_10, %c0_11] : memref<32x32xbf16, #tpu.memory_space<vmem>>, vector<32x32xbf16>
    %cst_12 = arith.constant dense<0.000000e+00> : vector<16x32xf32>
    %13 = tpu.matmul %1, %12, %cst_12 {dimension_numbers = #tpu.dot_dimension_numbers<[1], [0], [0], [1], [0, 0, 1, 1], [], []>} : vector<16x32xbf16>, vector<32x32xbf16>, vector<16x32xf32> -> vector<16x32xf32>
    %c0_13 = arith.constant 0 : index
    %c0_14 = arith.constant 0 : index
    %14 = vector.load %arg7[%c0_13, %c0_14] : memref<1x32xf32, #tpu.memory_space<vmem>>, vector<1x32xf32>
    %15 = vector.broadcast %14 : vector<1x32xf32> to vector<16x32xf32>
    %16 = arith.addf %13, %15 : vector<16x32xf32>
    %17 = vector.shape_cast %6 : vector<16x32xf32> to vector<2x8x32xf32>
    %18 = arith.truncf %17 : vector<2x8x32xf32> to vector<2x8x32xbf16>
    %19 = vector.shape_cast %11 : vector<16x32xf32> to vector<2x8x32xf32>
    %20 = arith.truncf %19 : vector<2x8x32xf32> to vector<2x8x32xbf16>
    %21 = vector.shape_cast %16 : vector<16x32xf32> to vector<2x8x32xf32>
    %22 = arith.truncf %21 : vector<2x8x32xf32> to vector<2x8x32xbf16>
    %cst_15 = arith.constant 0.000000e+00 : f32
    %23 = vector.broadcast %cst_15 : f32 to vector<16x32xf32>
    %24 = vector.extract_strided_slice %18 {offsets = [0, 0, 0], sizes = [2, 8, 8], strides = [1, 1, 1]} : vector<2x8x32xbf16> to vector<2x8x8xbf16>
    %25 = vector.extract_strided_slice %20 {offsets = [0, 0, 0], sizes = [2, 8, 8], strides = [1, 1, 1]} : vector<2x8x32xbf16> to vector<2x8x8xbf16>
    %26 = vector.extract_strided_slice %22 {offsets = [0, 0, 0], sizes = [2, 8, 8], strides = [1, 1, 1]} : vector<2x8x32xbf16> to vector<2x8x8xbf16>
    "tpu.trace_start"() <{level = 10 : i32, message = "bld,bmd->blm"}> : () -> ()
    %cst_16 = arith.constant dense<0.000000e+00> : vector<2x8x8xf32>
    %27 = tpu.matmul %24, %25, %cst_16 {dimension_numbers = #tpu.dot_dimension_numbers<[2], [2], [1], [1], [0, 0, 0, 1, 1, 1], [0], [0]>} : vector<2x8x8xbf16>, vector<2x8x8xbf16>, vector<2x8x8xf32> -> vector<2x8x8xf32>
    "tpu.trace_stop"() : () -> ()
    %cst_17 = arith.constant dense<0xFF800000> : vector<2x8xf32>
    %28 = vector.multi_reduction <maximumf>, %27, %cst_17 [2] : vector<2x8x8xf32> to vector<2x8xf32>
    %29 = vector.shape_cast %28 : vector<2x8xf32> to vector<2x8x1xf32>
    %30 = vector.broadcast %29 : vector<2x8x1xf32> to vector<2x8x8xf32>
    %31 = arith.subf %27, %30 : vector<2x8x8xf32>
    %32 = math.exp %31 : vector<2x8x8xf32>
    %cst_18 = arith.constant dense<0.000000e+00> : vector<2x8xf32>
    %33 = vector.multi_reduction <add>, %32, %cst_18 [2] : vector<2x8x8xf32> to vector<2x8xf32>
    %34 = vector.shape_cast %33 : vector<2x8xf32> to vector<2x8x1xf32>
    %35 = tpu.reciprocal %34 {approx = true} : vector<2x8x1xf32> -> vector<2x8x1xf32>
    %36 = vector.broadcast %35 : vector<2x8x1xf32> to vector<2x8x8xf32>
    %37 = arith.mulf %32, %36 : vector<2x8x8xf32>
    %38 = arith.truncf %37 : vector<2x8x8xf32> to vector<2x8x8xbf16>
    "tpu.trace_start"() <{level = 10 : i32, message = "blm,bmd->bld"}> : () -> ()
    %cst_19 = arith.constant dense<0.000000e+00> : vector<2x8x8xf32>
    %39 = tpu.matmul %38, %26, %cst_19 {dimension_numbers = #tpu.dot_dimension_numbers<[2], [1], [1], [2], [0, 0, 0, 1, 1, 2], [0], [0]>} : vector<2x8x8xbf16>, vector<2x8x8xbf16>, vector<2x8x8xf32> -> vector<2x8x8xf32>
    "tpu.trace_stop"() : () -> ()
    %40 = vector.shape_cast %39 : vector<2x8x8xf32> to vector<16x8xf32>
    %41 = arith.truncf %40 : vector<16x8xf32> to vector<16x8xbf16>
    %c0_20 = arith.constant 0 : index
    %c0_21 = arith.constant 0 : index
    %c0_22 = arith.constant 0 : index
    %42 = vector.load %arg8[%c0_20, %c0_21, %c0_22] : memref<4x8x32xbf16, #tpu.memory_space<vmem>>, vector<1x8x32xbf16>
    %43 = vector.shape_cast %42 : vector<1x8x32xbf16> to vector<8x32xbf16>
    %cst_23 = arith.constant dense<0.000000e+00> : vector<16x32xf32>
    %44 = tpu.matmul %41, %43, %cst_23 {dimension_numbers = #tpu.dot_dimension_numbers<[1], [0], [0], [1], [0, 0, 1, 1], [], []>} : vector<16x8xbf16>, vector<8x32xbf16>, vector<16x32xf32> -> vector<16x32xf32>
    %45 = arith.addf %23, %44 : vector<16x32xf32>
    %46 = vector.extract_strided_slice %18 {offsets = [0, 0, 8], sizes = [2, 8, 8], strides = [1, 1, 1]} : vector<2x8x32xbf16> to vector<2x8x8xbf16>
    %47 = vector.extract_strided_slice %20 {offsets = [0, 0, 8], sizes = [2, 8, 8], strides = [1, 1, 1]} : vector<2x8x32xbf16> to vector<2x8x8xbf16>
    %48 = vector.extract_strided_slice %22 {offsets = [0, 0, 8], sizes = [2, 8, 8], strides = [1, 1, 1]} : vector<2x8x32xbf16> to vector<2x8x8xbf16>
    "tpu.trace_start"() <{level = 10 : i32, message = "bld,bmd->blm"}> : () -> ()
    %cst_24 = arith.constant dense<0.000000e+00> : vector<2x8x8xf32>
    %49 = tpu.matmul %46, %47, %cst_24 {dimension_numbers = #tpu.dot_dimension_numbers<[2], [2], [1], [1], [0, 0, 0, 1, 1, 1], [0], [0]>} : vector<2x8x8xbf16>, vector<2x8x8xbf16>, vector<2x8x8xf32> -> vector<2x8x8xf32>
    "tpu.trace_stop"() : () -> ()
    %cst_25 = arith.constant dense<0xFF800000> : vector<2x8xf32>
    %50 = vector.multi_reduction <maximumf>, %49, %cst_25 [2] : vector<2x8x8xf32> to vector<2x8xf32>
    %51 = vector.shape_cast %50 : vector<2x8xf32> to vector<2x8x1xf32>
    %52 = vector.broadcast %51 : vector<2x8x1xf32> to vector<2x8x8xf32>
    %53 = arith.subf %49, %52 : vector<2x8x8xf32>
    %54 = math.exp %53 : vector<2x8x8xf32>
    %cst_26 = arith.constant dense<0.000000e+00> : vector<2x8xf32>
    %55 = vector.multi_reduction <add>, %54, %cst_26 [2] : vector<2x8x8xf32> to vector<2x8xf32>
    %56 = vector.shape_cast %55 : vector<2x8xf32> to vector<2x8x1xf32>
    %57 = tpu.reciprocal %56 {approx = true} : vector<2x8x1xf32> -> vector<2x8x1xf32>
    %58 = vector.broadcast %57 : vector<2x8x1xf32> to vector<2x8x8xf32>
    %59 = arith.mulf %54, %58 : vector<2x8x8xf32>
    %60 = arith.truncf %59 : vector<2x8x8xf32> to vector<2x8x8xbf16>
    "tpu.trace_start"() <{level = 10 : i32, message = "blm,bmd->bld"}> : () -> ()
    %cst_27 = arith.constant dense<0.000000e+00> : vector<2x8x8xf32>
    %61 = tpu.matmul %60, %48, %cst_27 {dimension_numbers = #tpu.dot_dimension_numbers<[2], [1], [1], [2], [0, 0, 0, 1, 1, 2], [0], [0]>} : vector<2x8x8xbf16>, vector<2x8x8xbf16>, vector<2x8x8xf32> -> vector<2x8x8xf32>
    "tpu.trace_stop"() : () -> ()
    %62 = vector.shape_cast %61 : vector<2x8x8xf32> to vector<16x8xf32>
    %63 = arith.truncf %62 : vector<16x8xf32> to vector<16x8xbf16>
    %c1 = arith.constant 1 : index
    %c0_28 = arith.constant 0 : index
    %c0_29 = arith.constant 0 : index
    %64 = vector.load %arg8[%c1, %c0_28, %c0_29] : memref<4x8x32xbf16, #tpu.memory_space<vmem>>, vector<1x8x32xbf16>
    %65 = vector.shape_cast %64 : vector<1x8x32xbf16> to vector<8x32xbf16>
    %cst_30 = arith.constant dense<0.000000e+00> : vector<16x32xf32>
    %66 = tpu.matmul %63, %65, %cst_30 {dimension_numbers = #tpu.dot_dimension_numbers<[1], [0], [0], [1], [0, 0, 1, 1], [], []>} : vector<16x8xbf16>, vector<8x32xbf16>, vector<16x32xf32> -> vector<16x32xf32>
    %67 = arith.addf %45, %66 : vector<16x32xf32>
    %68 = vector.extract_strided_slice %18 {offsets = [0, 0, 16], sizes = [2, 8, 8], strides = [1, 1, 1]} : vector<2x8x32xbf16> to vector<2x8x8xbf16>
    %69 = vector.extract_strided_slice %20 {offsets = [0, 0, 16], sizes = [2, 8, 8], strides = [1, 1, 1]} : vector<2x8x32xbf16> to vector<2x8x8xbf16>
    %70 = vector.extract_strided_slice %22 {offsets = [0, 0, 16], sizes = [2, 8, 8], strides = [1, 1, 1]} : vector<2x8x32xbf16> to vector<2x8x8xbf16>
    "tpu.trace_start"() <{level = 10 : i32, message = "bld,bmd->blm"}> : () -> ()
    %cst_31 = arith.constant dense<0.000000e+00> : vector<2x8x8xf32>
    %71 = tpu.matmul %68, %69, %cst_31 {dimension_numbers = #tpu.dot_dimension_numbers<[2], [2], [1], [1], [0, 0, 0, 1, 1, 1], [0], [0]>} : vector<2x8x8xbf16>, vector<2x8x8xbf16>, vector<2x8x8xf32> -> vector<2x8x8xf32>
    "tpu.trace_stop"() : () -> ()
    %cst_32 = arith.constant dense<0xFF800000> : vector<2x8xf32>
    %72 = vector.multi_reduction <maximumf>, %71, %cst_32 [2] : vector<2x8x8xf32> to vector<2x8xf32>
    %73 = vector.shape_cast %72 : vector<2x8xf32> to vector<2x8x1xf32>
    %74 = vector.broadcast %73 : vector<2x8x1xf32> to vector<2x8x8xf32>
    %75 = arith.subf %71, %74 : vector<2x8x8xf32>
    %76 = math.exp %75 : vector<2x8x8xf32>
    %cst_33 = arith.constant dense<0.000000e+00> : vector<2x8xf32>
    %77 = vector.multi_reduction <add>, %76, %cst_33 [2] : vector<2x8x8xf32> to vector<2x8xf32>
    %78 = vector.shape_cast %77 : vector<2x8xf32> to vector<2x8x1xf32>
    %79 = tpu.reciprocal %78 {approx = true} : vector<2x8x1xf32> -> vector<2x8x1xf32>
    %80 = vector.broadcast %79 : vector<2x8x1xf32> to vector<2x8x8xf32>
    %81 = arith.mulf %76, %80 : vector<2x8x8xf32>
    %82 = arith.truncf %81 : vector<2x8x8xf32> to vector<2x8x8xbf16>
    "tpu.trace_start"() <{level = 10 : i32, message = "blm,bmd->bld"}> : () -> ()
    %cst_34 = arith.constant dense<0.000000e+00> : vector<2x8x8xf32>
    %83 = tpu.matmul %82, %70, %cst_34 {dimension_numbers = #tpu.dot_dimension_numbers<[2], [1], [1], [2], [0, 0, 0, 1, 1, 2], [0], [0]>} : vector<2x8x8xbf16>, vector<2x8x8xbf16>, vector<2x8x8xf32> -> vector<2x8x8xf32>
    "tpu.trace_stop"() : () -> ()
    %84 = vector.shape_cast %83 : vector<2x8x8xf32> to vector<16x8xf32>
    %85 = arith.truncf %84 : vector<16x8xf32> to vector<16x8xbf16>
    %c2 = arith.constant 2 : index
    %c0_35 = arith.constant 0 : index
    %c0_36 = arith.constant 0 : index
    %86 = vector.load %arg8[%c2, %c0_35, %c0_36] : memref<4x8x32xbf16, #tpu.memory_space<vmem>>, vector<1x8x32xbf16>
    %87 = vector.shape_cast %86 : vector<1x8x32xbf16> to vector<8x32xbf16>
    %cst_37 = arith.constant dense<0.000000e+00> : vector<16x32xf32>
    %88 = tpu.matmul %85, %87, %cst_37 {dimension_numbers = #tpu.dot_dimension_numbers<[1], [0], [0], [1], [0, 0, 1, 1], [], []>} : vector<16x8xbf16>, vector<8x32xbf16>, vector<16x32xf32> -> vector<16x32xf32>
    %89 = arith.addf %67, %88 : vector<16x32xf32>
    %90 = vector.extract_strided_slice %18 {offsets = [0, 0, 24], sizes = [2, 8, 8], strides = [1, 1, 1]} : vector<2x8x32xbf16> to vector<2x8x8xbf16>
    %91 = vector.extract_strided_slice %20 {offsets = [0, 0, 24], sizes = [2, 8, 8], strides = [1, 1, 1]} : vector<2x8x32xbf16> to vector<2x8x8xbf16>
    %92 = vector.extract_strided_slice %22 {offsets = [0, 0, 24], sizes = [2, 8, 8], strides = [1, 1, 1]} : vector<2x8x32xbf16> to vector<2x8x8xbf16>
    "tpu.trace_start"() <{level = 10 : i32, message = "bld,bmd->blm"}> : () -> ()
    %cst_38 = arith.constant dense<0.000000e+00> : vector<2x8x8xf32>
    %93 = tpu.matmul %90, %91, %cst_38 {dimension_numbers = #tpu.dot_dimension_numbers<[2], [2], [1], [1], [0, 0, 0, 1, 1, 1], [0], [0]>} : vector<2x8x8xbf16>, vector<2x8x8xbf16>, vector<2x8x8xf32> -> vector<2x8x8xf32>
    "tpu.trace_stop"() : () -> ()
    %cst_39 = arith.constant dense<0xFF800000> : vector<2x8xf32>
    %94 = vector.multi_reduction <maximumf>, %93, %cst_39 [2] : vector<2x8x8xf32> to vector<2x8xf32>
    %95 = vector.shape_cast %94 : vector<2x8xf32> to vector<2x8x1xf32>
    %96 = vector.broadcast %95 : vector<2x8x1xf32> to vector<2x8x8xf32>
    %97 = arith.subf %93, %96 : vector<2x8x8xf32>
    %98 = math.exp %97 : vector<2x8x8xf32>
    %cst_40 = arith.constant dense<0.000000e+00> : vector<2x8xf32>
    %99 = vector.multi_reduction <add>, %98, %cst_40 [2] : vector<2x8x8xf32> to vector<2x8xf32>
    %100 = vector.shape_cast %99 : vector<2x8xf32> to vector<2x8x1xf32>
    %101 = tpu.reciprocal %100 {approx = true} : vector<2x8x1xf32> -> vector<2x8x1xf32>
    %102 = vector.broadcast %101 : vector<2x8x1xf32> to vector<2x8x8xf32>
    %103 = arith.mulf %98, %102 : vector<2x8x8xf32>
    %104 = arith.truncf %103 : vector<2x8x8xf32> to vector<2x8x8xbf16>
    "tpu.trace_start"() <{level = 10 : i32, message = "blm,bmd->bld"}> : () -> ()
    %cst_41 = arith.constant dense<0.000000e+00> : vector<2x8x8xf32>
    %105 = tpu.matmul %104, %92, %cst_41 {dimension_numbers = #tpu.dot_dimension_numbers<[2], [1], [1], [2], [0, 0, 0, 1, 1, 2], [0], [0]>} : vector<2x8x8xbf16>, vector<2x8x8xbf16>, vector<2x8x8xf32> -> vector<2x8x8xf32>
    "tpu.trace_stop"() : () -> ()
    %106 = vector.shape_cast %105 : vector<2x8x8xf32> to vector<16x8xf32>
    %107 = arith.truncf %106 : vector<16x8xf32> to vector<16x8xbf16>
    %c3 = arith.constant 3 : index
    %c0_42 = arith.constant 0 : index
    %c0_43 = arith.constant 0 : index
    %108 = vector.load %arg8[%c3, %c0_42, %c0_43] : memref<4x8x32xbf16, #tpu.memory_space<vmem>>, vector<1x8x32xbf16>
    %109 = vector.shape_cast %108 : vector<1x8x32xbf16> to vector<8x32xbf16>
    %cst_44 = arith.constant dense<0.000000e+00> : vector<16x32xf32>
    %110 = tpu.matmul %107, %109, %cst_44 {dimension_numbers = #tpu.dot_dimension_numbers<[1], [0], [0], [1], [0, 0, 1, 1], [], []>} : vector<16x8xbf16>, vector<8x32xbf16>, vector<16x32xf32> -> vector<16x32xf32>
    %111 = arith.addf %89, %110 : vector<16x32xf32>
    %c0_45 = arith.constant 0 : index
    %c0_46 = arith.constant 0 : index
    %112 = vector.load %arg9[%c0_45, %c0_46] : memref<1x32xf32, #tpu.memory_space<vmem>>, vector<1x32xf32>
    %113 = vector.broadcast %112 : vector<1x32xf32> to vector<16x32xf32>
    %114 = arith.addf %111, %113 : vector<16x32xf32>
    %115 = arith.addf %0, %114 : vector<16x32xf32>
    %cst_47 = arith.constant dense<0.000000e+00> : vector<32xf32>
    %116 = vector.multi_reduction <add>, %115, %cst_47 [0] : vector<16x32xf32> to vector<32xf32>
    %117 = vector.shape_cast %116 : vector<32xf32> to vector<1x32xf32>
    %cst_48 = arith.constant 1.600000e+01 : f32
    %118 = vector.broadcast %cst_48 : f32 to vector<1x32xf32>
    %119 = arith.divf %117, %118 : vector<1x32xf32>
    %120 = vector.broadcast %119 : vector<1x32xf32> to vector<16x32xf32>
    %121 = arith.subf %115, %120 : vector<16x32xf32>
    %122 = arith.mulf %121, %121 : vector<16x32xf32>
    %cst_49 = arith.constant dense<0.000000e+00> : vector<32xf32>
    %123 = vector.multi_reduction <add>, %122, %cst_49 [0] : vector<16x32xf32> to vector<32xf32>
    %124 = vector.shape_cast %123 : vector<32xf32> to vector<1x32xf32>
    %cst_50 = arith.constant 1.600000e+01 : f32
    %125 = vector.broadcast %cst_50 : f32 to vector<1x32xf32>
    %126 = arith.divf %124, %125 : vector<1x32xf32>
    %cst_51 = arith.constant 9.99999974E-6 : f32
    %127 = vector.broadcast %cst_51 : f32 to vector<1x32xf32>
    %128 = arith.addf %126, %127 : vector<1x32xf32>
    %129 = math.rsqrt %128 : vector<1x32xf32>
    %130 = vector.broadcast %129 : vector<1x32xf32> to vector<16x32xf32>
    %131 = arith.mulf %121, %130 : vector<16x32xf32>
    %c0_52 = arith.constant 0 : index
    %c0_53 = arith.constant 0 : index
    %132 = vector.load %arg10[%c0_52, %c0_53] : memref<1x32xf32, #tpu.memory_space<vmem>>, vector<1x32xf32>
    %133 = vector.broadcast %132 : vector<1x32xf32> to vector<16x32xf32>
    %134 = arith.mulf %131, %133 : vector<16x32xf32>
    %c0_54 = arith.constant 0 : index
    %c0_55 = arith.constant 0 : index
    %135 = vector.load %arg11[%c0_54, %c0_55] : memref<1x32xf32, #tpu.memory_space<vmem>>, vector<1x32xf32>
    %136 = vector.broadcast %135 : vector<1x32xf32> to vector<16x32xf32>
    %137 = arith.addf %134, %136 : vector<16x32xf32>
    %138 = arith.truncf %137 : vector<16x32xf32> to vector<16x32xbf16>
    %c0_56 = arith.constant 0 : index
    %c0_57 = arith.constant 0 : index
    %139 = vector.load %arg12[%c0_56, %c0_57] : memref<32x64xbf16, #tpu.memory_space<vmem>>, vector<32x64xbf16>
    %cst_58 = arith.constant dense<0.000000e+00> : vector<16x64xf32>
    %140 = tpu.matmul %138, %139, %cst_58 {dimension_numbers = #tpu.dot_dimension_numbers<[1], [0], [0], [1], [0, 0, 1, 1], [], []>} : vector<16x32xbf16>, vector<32x64xbf16>, vector<16x64xf32> -> vector<16x64xf32>
    %c0_59 = arith.constant 0 : index
    %c0_60 = arith.constant 0 : index
    %141 = vector.load %arg13[%c0_59, %c0_60] : memref<1x64xf32, #tpu.memory_space<vmem>>, vector<1x64xf32>
    %142 = vector.broadcast %141 : vector<1x64xf32> to vector<16x64xf32>
    %143 = arith.addf %140, %142 : vector<16x64xf32>
    %cst_61 = arith.constant 5.000000e-01 : f32
    %144 = vector.broadcast %cst_61 : f32 to vector<16x64xf32>
    %145 = arith.mulf %144, %143 : vector<16x64xf32>
    %cst_62 = arith.constant 4.471500e-02 : f32
    %146 = vector.broadcast %cst_62 : f32 to vector<16x64xf32>
    %147 = arith.mulf %146, %143 : vector<16x64xf32>
    %148 = arith.mulf %147, %143 : vector<16x64xf32>
    %149 = arith.mulf %148, %143 : vector<16x64xf32>
    %150 = arith.addf %143, %149 : vector<16x64xf32>
    %cst_63 = arith.constant 0.797884583 : f32
    %151 = vector.broadcast %cst_63 : f32 to vector<16x64xf32>
    %152 = arith.mulf %151, %150 : vector<16x64xf32>
    %153 = math.tanh %152 : vector<16x64xf32>
    %cst_64 = arith.constant 1.000000e+00 : f32
    %154 = vector.broadcast %cst_64 : f32 to vector<16x64xf32>
    %155 = arith.addf %154, %153 : vector<16x64xf32>
    %156 = arith.mulf %145, %155 : vector<16x64xf32>
    %157 = arith.truncf %156 : vector<16x64xf32> to vector<16x64xbf16>
    %c0_65 = arith.constant 0 : index
    %c0_66 = arith.constant 0 : index
    %158 = vector.load %arg14[%c0_65, %c0_66] : memref<64x32xbf16, #tpu.memory_space<vmem>>, vector<64x32xbf16>
    %cst_67 = arith.constant dense<0.000000e+00> : vector<16x32xf32>
    %159 = tpu.matmul %157, %158, %cst_67 {dimension_numbers = #tpu.dot_dimension_numbers<[1], [0], [0], [1], [0, 0, 1, 1], [], []>} : vector<16x64xbf16>, vector<64x32xbf16>, vector<16x32xf32> -> vector<16x32xf32>
    %c0_68 = arith.constant 0 : index
    %c0_69 = arith.constant 0 : index
    %160 = vector.load %arg15[%c0_68, %c0_69] : memref<1x32xf32, #tpu.memory_space<vmem>>, vector<1x32xf32>
    %161 = vector.broadcast %160 : vector<1x32xf32> to vector<16x32xf32>
    %162 = arith.addf %159, %161 : vector<16x32xf32>
    %163 = arith.addf %137, %162 : vector<16x32xf32>
    %cst_70 = arith.constant dense<0.000000e+00> : vector<32xf32>
    %164 = vector.multi_reduction <add>, %163, %cst_70 [0] : vector<16x32xf32> to vector<32xf32>
    %165 = vector.shape_cast %164 : vector<32xf32> to vector<1x32xf32>
    %cst_71 = arith.constant 1.600000e+01 : f32
    %166 = vector.broadcast %cst_71 : f32 to vector<1x32xf32>
    %167 = arith.divf %165, %166 : vector<1x32xf32>
    %168 = vector.broadcast %167 : vector<1x32xf32> to vector<16x32xf32>
    %169 = arith.subf %163, %168 : vector<16x32xf32>
    %170 = arith.mulf %169, %169 : vector<16x32xf32>
    %cst_72 = arith.constant dense<0.000000e+00> : vector<32xf32>
    %171 = vector.multi_reduction <add>, %170, %cst_72 [0] : vector<16x32xf32> to vector<32xf32>
    %172 = vector.shape_cast %171 : vector<32xf32> to vector<1x32xf32>
    %cst_73 = arith.constant 1.600000e+01 : f32
    %173 = vector.broadcast %cst_73 : f32 to vector<1x32xf32>
    %174 = arith.divf %172, %173 : vector<1x32xf32>
    %cst_74 = arith.constant 9.99999974E-6 : f32
    %175 = vector.broadcast %cst_74 : f32 to vector<1x32xf32>
    %176 = arith.addf %174, %175 : vector<1x32xf32>
    %177 = math.rsqrt %176 : vector<1x32xf32>
    %178 = vector.broadcast %177 : vector<1x32xf32> to vector<16x32xf32>
    %179 = arith.mulf %169, %178 : vector<16x32xf32>
    %c0_75 = arith.constant 0 : index
    %c0_76 = arith.constant 0 : index
    %180 = vector.load %arg16[%c0_75, %c0_76] : memref<1x32xf32, #tpu.memory_space<vmem>>, vector<1x32xf32>
    %181 = vector.broadcast %180 : vector<1x32xf32> to vector<16x32xf32>
    %182 = arith.mulf %179, %181 : vector<16x32xf32>
    %c0_77 = arith.constant 0 : index
    %c0_78 = arith.constant 0 : index
    %183 = vector.load %arg17[%c0_77, %c0_78] : memref<1x32xf32, #tpu.memory_space<vmem>>, vector<1x32xf32>
    %184 = vector.broadcast %183 : vector<1x32xf32> to vector<16x32xf32>
    %185 = arith.addf %182, %184 : vector<16x32xf32>
    %c0_79 = arith.constant 0 : index
    %c0_80 = arith.constant 0 : index
    %186 = vector.load %arg18[%c0_79, %c0_80] : memref<16x32xf32, #tpu.memory_space<vmem>>, vector<16x32xf32>
    tpu.vector_store %arg18[%c0_79, %c0_80], %185 {strides = array<i32>} : memref<16x32xf32, #tpu.memory_space<vmem>>, vector<16x32xf32>,
    return
  }
  func.func @transform_0(%arg0: i32) -> (i32, i32) {
    %c0_i32 = arith.constant 0 : i32
    %c0_i32_0 = arith.constant 0 : i32
    %c0_i32_1 = arith.constant 0 : i32
    return %c0_i32, %c0_i32_0 : i32, i32
  }
  func.func @transform_1(%arg0: i32) -> (i32, i32) {
    %c0_i32 = arith.constant 0 : i32
    %c0_i32_0 = arith.constant 0 : i32
    %c0_i32_1 = arith.constant 0 : i32
    return %c0_i32, %c0_i32_0 : i32, i32
  }
  func.func @transform_2(%arg0: i32) -> (i32, i32) {
    %c0_i32 = arith.constant 0 : i32
    %c0_i32_0 = arith.constant 0 : i32
    %c0_i32_1 = arith.constant 0 : i32
    return %c0_i32, %c0_i32_0 : i32, i32
  }
  func.func @transform_3(%arg0: i32) -> (i32, i32) {
    %c0_i32 = arith.constant 0 : i32
    %c0_i32_0 = arith.constant 0 : i32
    %c0_i32_1 = arith.constant 0 : i32
    return %c0_i32, %c0_i32_0 : i32, i32
  }
  func.func @transform_4(%arg0: i32) -> (i32, i32) {
    %c0_i32 = arith.constant 0 : i32
    %c0_i32_0 = arith.constant 0 : i32
    %c0_i32_1 = arith.constant 0 : i32
    return %c0_i32, %c0_i32_0 : i32, i32
  }
  func.func @transform_5(%arg0: i32) -> (i32, i32) {
    %c0_i32 = arith.constant 0 : i32
    %c0_i32_0 = arith.constant 0 : i32
    %c0_i32_1 = arith.constant 0 : i32
    return %c0_i32, %c0_i32_0 : i32, i32
  }
  func.func @transform_6(%arg0: i32) -> (i32, i32) {
    %c0_i32 = arith.constant 0 : i32
    %c0_i32_0 = arith.constant 0 : i32
    %c0_i32_1 = arith.constant 0 : i32
    return %c0_i32, %c0_i32_0 : i32, i32
  }
  func.func @transform_7(%arg0: i32) -> (i32, i32, i32) {
    %c0_i32 = arith.constant 0 : i32
    %c0_i32_0 = arith.constant 0 : i32
    %c0_i32_1 = arith.constant 0 : i32
    %c0_i32_2 = arith.constant 0 : i32
    return %c0_i32, %c0_i32_0, %c0_i32_1 : i32, i32, i32
  }
  func.func @transform_8(%arg0: i32) -> (i32, i32) {
    %c0_i32 = arith.constant 0 : i32
    %c0_i32_0 = arith.constant 0 : i32
    %c0_i32_1 = arith.constant 0 : i32
    return %c0_i32, %c0_i32_0 : i32, i32
  }
  func.func @transform_9(%arg0: i32) -> (i32, i32) {
    %c0_i32 = arith.constant 0 : i32
    %c0_i32_0 = arith.constant 0 : i32
    %c0_i32_1 = arith.constant 0 : i32
    return %c0_i32, %c0_i32_0 : i32, i32
  }
  func.func @transform_10(%arg0: i32) -> (i32, i32) {
    %c0_i32 = arith.constant 0 : i32
    %c0_i32_0 = arith.constant 0 : i32
    %c0_i32_1 = arith.constant 0 : i32
    return %c0_i32, %c0_i32_0 : i32, i32
  }
  func.func @transform_11(%arg0: i32) -> (i32, i32) {
    %c0_i32 = arith.constant 0 : i32
    %c0_i32_0 = arith.constant 0 : i32
    %c0_i32_1 = arith.constant 0 : i32
    return %c0_i32, %c0_i32_0 : i32, i32
  }
  func.func @transform_12(%arg0: i32) -> (i32, i32) {
    %c0_i32 = arith.constant 0 : i32
    %c0_i32_0 = arith.constant 0 : i32
    %c0_i32_1 = arith.constant 0 : i32
    return %c0_i32, %c0_i32_0 : i32, i32
  }
  func.func @transform_13(%arg0: i32) -> (i32, i32) {
    %c0_i32 = arith.constant 0 : i32
    %c0_i32_0 = arith.constant 0 : i32
    %c0_i32_1 = arith.constant 0 : i32
    return %c0_i32, %c0_i32_0 : i32, i32
  }
  func.func @transform_14(%arg0: i32) -> (i32, i32) {
    %c0_i32 = arith.constant 0 : i32
    %c0_i32_0 = arith.constant 0 : i32
    %c0_i32_1 = arith.constant 0 : i32
    return %c0_i32, %c0_i32_0 : i32, i32
  }
  func.func @transform_15(%arg0: i32) -> (i32, i32) {
    %c0_i32 = arith.constant 0 : i32
    %c0_i32_0 = arith.constant 0 : i32
    %c0_i32_1 = arith.constant 0 : i32
    return %c0_i32, %c0_i32_0 : i32, i32
  }
  func.func @transform_16(%arg0: i32) -> (i32, i32) {
    %c0_i32 = arith.constant 0 : i32
    %c0_i32_0 = arith.constant 0 : i32
    %c0_i32_1 = arith.constant 0 : i32
    return %c0_i32, %c0_i32_0 : i32, i32
  }
  func.func @transform_17(%arg0: i32) -> (i32, i32) {
    %c0_i32 = arith.constant 0 : i32
    %c0_i32_0 = arith.constant 0 : i32
    %c0_i32_1 = arith.constant 0 : i32
    return %c0_i32, %c0_i32_0 : i32, i32
  }
}

</mosaic_0001>

<llo_original>
// kernel: tpu_custom_call.1
$region0: #{tpu_custom_call.1}
  #allocation0 [shape = 'u32[]', space=smem, size = 0x4, offset = 0x4, fixed_abs, tag = 'smem constant byte address 0x4 - core index']
  #allocation1 [shape = 'u32[72,128]{1,0:T(1,128)}', space=vmem, size = 0x9000, scoped, tag = 'internal scratch']
  %s0 = inlined_call_operand.vmem [shape: f32[16,32], index: 0, kind: input, shape index: {}]
  %s1 = inlined_call_operand.vmem [shape: bf16[32,32], index: 1, kind: input, shape index: {}]
  %s2 = inlined_call_operand.vmem [shape: f32[1,32], index: 2, kind: input, shape index: {}]
  %s3 = inlined_call_operand.vmem [shape: bf16[32,32], index: 3, kind: input, shape index: {}]
  %s4 = inlined_call_operand.vmem [shape: f32[1,32], index: 4, kind: input, shape index: {}]
  %s5 = inlined_call_operand.hbm [shape: bf16[32,32], index: 5, kind: input, shape index: {}]
  %s6 = inlined_call_operand.vmem [shape: f32[1,32], index: 6, kind: input, shape index: {}]
  %s7 = inlined_call_operand.hbm [shape: bf16[4,8,32], index: 7, kind: input, shape index: {}]
  %s8 = inlined_call_operand.vmem [shape: f32[1,32], index: 8, kind: input, shape index: {}]
  %s9 = inlined_call_operand.vmem [shape: f32[1,32], index: 9, kind: input, shape index: {}]
  %s10 = inlined_call_operand.vmem [shape: f32[1,32], index: 10, kind: input, shape index: {}]
  %s11 = inlined_call_operand.hbm [shape: bf16[32,64], index: 11, kind: input, shape index: {}]
  %s12 = inlined_call_operand.vmem [shape: f32[1,64], index: 12, kind: input, shape index: {}]
  %s13 = inlined_call_operand.vmem [shape: bf16[64,32], index: 13, kind: input, shape index: {}]
  %s14 = inlined_call_operand.vmem [shape: f32[1,32], index: 14, kind: input, shape index: {}]
  %s15 = inlined_call_operand.vmem [shape: f32[1,32], index: 15, kind: input, shape index: {}]
  %s16 = inlined_call_operand.vmem [shape: f32[1,32], index: 16, kind: input, shape index: {}]
  %s17 = inlined_call_operand.hbm [shape: f32[16,32], index: 17, kind: output, shape index: {}]
  %s18 = sld [smem:[#allocation0]]
  $region90: #{tpu_custom_call.1} parent=0
    _
  %s20 = ssub.s32 1, %s18
  %s21 = scalar_select 0, %s20, %s18
  $region1: #{tpu_custom_call.1} parent=0
    #allocation2 [shape = 'u8[8192]{0}', space=vmem, size = 0x2000, scoped, tag = 'input window, operand 5, single buffered']
    #allocation3 [shape = 's32[1]{0}', space=sflag, size = 0x4, scoped, tag = 'scoped memory for tpu_custom_call.1']
    #allocation4 [shape = 's32[1]{0}', space=sflag, size = 0x4, scoped, tag = 'scoped memory for tpu_custom_call.1']
    #allocation5 [shape = 'u8[8192]{0}', space=vmem, size = 0x2000, scoped, tag = 'input window, operand 7, single buffered']
    #allocation6 [shape = 's32[1]{0}', space=sflag, size = 0x4, scoped, tag = 'scoped memory for tpu_custom_call.1']
    #allocation7 [shape = 'u8[8192]{0}', space=vmem, size = 0x2000, scoped, tag = 'input window, operand 11, single buffered']
    #allocation8 [shape = 'u8[8192]{0}', space=vmem, size = 0x2000, scoped, tag = 'output window, operand 0, single buffered']
    %22 = vsyncpa [#allocation3], 0
    %23 = vsyncpa [#allocation6], 0
    %24 = vsyncpa [#allocation4], 0
    // Predicated region
    $region2: #{tpu_custom_call.1} parent=1 // pred_check
      _
    $region3: #{tpu_custom_call.1} parent=1 // pred_check_branch
      %26 = sbr.rel (0) target = $region5
    $region4: #{tpu_custom_call.1} parent=1 // pred_region
      _
    $region5: #{tpu_custom_call.1} parent=1 // pred_fallthru
      _
    // Predicated region
    $region6: #{tpu_custom_call.1} parent=1 // pred_check
      _
    $region7: #{tpu_custom_call.1} parent=1 // pred_check_branch
      %28 = sbr.rel (0) target = $region9
    $region8: #{tpu_custom_call.1} parent=1 // pred_region
      _
    $region9: #{tpu_custom_call.1} parent=1 // pred_fallthru
      _
    // Predicated region
    $region10: #{tpu_custom_call.1} parent=1 // pred_check
      _
    $region11: #{tpu_custom_call.1} parent=1 // pred_check_branch
      %30 = sbr.rel (0) target = $region13
    $region12: #{tpu_custom_call.1} parent=1 // pred_region
      _
    $region13: #{tpu_custom_call.1} parent=1 // pred_fallthru
      _
    // Predicated region
    $region14: #{tpu_custom_call.1} parent=1 // pred_check
      _
    $region15: #{tpu_custom_call.1} parent=1 // pred_check_branch
      %32 = sbr.rel (0) target = $region17
    $region16: #{tpu_custom_call.1} parent=1 // pred_region
      _
    $region17: #{tpu_custom_call.1} parent=1 // pred_fallthru
      _
    // Predicated region
    $region18: #{tpu_custom_call.1} parent=1 // pred_check
      _
    $region19: #{tpu_custom_call.1} parent=1 // pred_check_branch
      %34 = sbr.rel (0) target = $region21
    $region20: #{tpu_custom_call.1} parent=1 // pred_region
      _
    $region21: #{tpu_custom_call.1} parent=1 // pred_fallthru
      _
    // Predicated region
    $region22: #{tpu_custom_call.1} parent=1 // pred_check
      _
    $region23: #{tpu_custom_call.1} parent=1 // pred_check_branch
      %36 = sbr.rel (0) target = $region25
    $region24: #{tpu_custom_call.1} parent=1 // pred_region
      %38 = vsyncadd [#allocation3], 0
      %s39 = sshll.u32 %s5, 4
      %s40 = int_to_ptr.hbm [resolvable:$true] %s39
      %s41 = sshll.u32 [#allocation2], 4
      %s42 = int_to_ptr.vmem [resolvable:$true] %s41
      %47 = dma.hbm_to_vmem [thread:$0]  %s40, 256, %s42, [#allocation3], 64, 64, 4
    $region25: #{tpu_custom_call.1} parent=1 // pred_fallthru
      _
    // Predicated region
    $region26: #{tpu_custom_call.1} parent=1 // pred_check
      _
    $region27: #{tpu_custom_call.1} parent=1 // pred_check_branch
      %49 = sbr.rel (0) target = $region29
    $region28: #{tpu_custom_call.1} parent=1 // pred_region
      _
    $region29: #{tpu_custom_call.1} parent=1 // pred_fallthru
      _
    // Predicated region
    $region30: #{tpu_custom_call.1} parent=1 // pred_check
      _
    $region31: #{tpu_custom_call.1} parent=1 // pred_check_branch
      %51 = sbr.rel (0) target = $region33
    $region32: #{tpu_custom_call.1} parent=1 // pred_region
      %53 = vsyncadd [#allocation6], 0
      %s54 = sshll.u32 %s7, 4
      %s55 = int_to_ptr.hbm [resolvable:$true] %s54
      %s56 = sshll.u32 [#allocation5], 4
      %s57 = int_to_ptr.vmem [resolvable:$true] %s56
      %62 = dma.hbm_to_vmem [thread:$0]  %s55, 256, %s57, [#allocation6], 64, 64, 4
    $region33: #{tpu_custom_call.1} parent=1 // pred_fallthru
      _
    // Predicated region
    $region34: #{tpu_custom_call.1} parent=1 // pred_check
      _
    $region35: #{tpu_custom_call.1} parent=1 // pred_check_branch
      %64 = sbr.rel (0) target = $region37
    $region36: #{tpu_custom_call.1} parent=1 // pred_region
      _
    $region37: #{tpu_custom_call.1} parent=1 // pred_fallthru
      _
    // Predicated region
    $region38: #{tpu_custom_call.1} parent=1 // pred_check
      _
    $region39: #{tpu_custom_call.1} parent=1 // pred_check_branch
      %66 = sbr.rel (0) target = $region41
    $region40: #{tpu_custom_call.1} parent=1 // pred_region
      _
    $region41: #{tpu_custom_call.1} parent=1 // pred_fallthru
      _
    // Predicated region
    $region42: #{tpu_custom_call.1} parent=1 // pred_check
      _
    $region43: #{tpu_custom_call.1} parent=1 // pred_check_branch
      %68 = sbr.rel (0) target = $region45
    $region44: #{tpu_custom_call.1} parent=1 // pred_region
      _
    $region45: #{tpu_custom_call.1} parent=1 // pred_fallthru
      _
    // Predicated region
    $region46: #{tpu_custom_call.1} parent=1 // pred_check
      _
    $region47: #{tpu_custom_call.1} parent=1 // pred_check_branch
      %70 = sbr.rel (0) target = $region49
    $region48: #{tpu_custom_call.1} parent=1 // pred_region
      %72 = vsyncadd [#allocation6], 0
      %s73 = sshll.u32 %s11, 4
      %s74 = int_to_ptr.hbm [resolvable:$true] %s73
      %s75 = sshll.u32 [#allocation7], 4
      %s76 = int_to_ptr.vmem [resolvable:$true] %s75
      %81 = dma.hbm_to_vmem [thread:$0]  %s74, 256, %s76, [#allocation6], 64, 64, 4
    $region49: #{tpu_custom_call.1} parent=1 // pred_fallthru
      _
    // Predicated region
    $region50: #{tpu_custom_call.1} parent=1 // pred_check
      _
    $region51: #{tpu_custom_call.1} parent=1 // pred_check_branch
      %83 = sbr.rel (0) target = $region53
    $region52: #{tpu_custom_call.1} parent=1 // pred_region
      _
    $region53: #{tpu_custom_call.1} parent=1 // pred_fallthru
      _
    // Predicated region
    $region54: #{tpu_custom_call.1} parent=1 // pred_check
      _
    $region55: #{tpu_custom_call.1} parent=1 // pred_check_branch
      %85 = sbr.rel (0) target = $region57
    $region56: #{tpu_custom_call.1} parent=1 // pred_region
      _
    $region57: #{tpu_custom_call.1} parent=1 // pred_fallthru
      _
    // Predicated region
    $region58: #{tpu_custom_call.1} parent=1 // pred_check
      _
    $region59: #{tpu_custom_call.1} parent=1 // pred_check_branch
      %87 = sbr.rel (0) target = $region61
    $region60: #{tpu_custom_call.1} parent=1 // pred_region
      _
    $region61: #{tpu_custom_call.1} parent=1 // pred_fallthru
      _
    // Predicated region
    $region62: #{tpu_custom_call.1} parent=1 // pred_check
      _
    $region63: #{tpu_custom_call.1} parent=1 // pred_check_branch
      %89 = sbr.rel (0) target = $region65
    $region64: #{tpu_custom_call.1} parent=1 // pred_region
      _
    $region65: #{tpu_custom_call.1} parent=1 // pred_fallthru
      _
    // Predicated region
    $region66: #{tpu_custom_call.1} parent=1 // pred_check
      _
    $region67: #{tpu_custom_call.1} parent=1 // pred_check_branch
      %91 = sbr.rel (0) target = $region69
    $region68: #{tpu_custom_call.1} parent=1 // pred_region
      _
    $region69: #{tpu_custom_call.1} parent=1 // pred_fallthru
      _
    // Predicated region
    $region70: #{tpu_custom_call.1} parent=1 // pred_check
      _
    $region71: #{tpu_custom_call.1} parent=1 // pred_check_branch
      %93 = sbr.rel (0) target = $region73
    $region72: #{tpu_custom_call.1} parent=1 // pred_region
      %95 = dma.done [#allocation3], 256
    $region73: #{tpu_custom_call.1} parent=1 // pred_fallthru
      _
    // Predicated region
    $region74: #{tpu_custom_call.1} parent=1 // pred_check
      _
    $region75: #{tpu_custom_call.1} parent=1 // pred_check_branch
      %97 = sbr.rel (0) target = $region77
    $region76: #{tpu_custom_call.1} parent=1 // pred_region
      %99 = dma.done [#allocation6], 256
    $region77: #{tpu_custom_call.1} parent=1 // pred_fallthru
      _
    // Predicated region
    $region78: #{tpu_custom_call.1} parent=1 // pred_check
      _
    $region79: #{tpu_custom_call.1} parent=1 // pred_check_branch
      %101 = sbr.rel (0) target = $region81
    $region80: #{tpu_custom_call.1} parent=1 // pred_region
      %103 = dma.done [#allocation6], 256
    $region81: #{tpu_custom_call.1} parent=1 // pred_fallthru
      _
    %v105 = vld [vmem:[%s0] sm:$0xff]
    %v106 = vld [vmem:[%s0 + $0x8] sm:$0xff]
    %v107 = vpack.c.bf16 %v106, %v105
    %v108 = vld [vmem:[%s1] sm:$0xf]
    %v109 = vld [vmem:[%s1 + $0x4] sm:$0xf]
    %v110 = vld [vmem:[%s1 + $0x8] sm:$0xf]
    %v111 = vld [vmem:[%s1 + $0xc] sm:$0xf]
    %v112 = vld [vmem:[%s2] sm:$0x1]
    %v114 = vperm.slane %v112, 0
    %v120 = vunpack.c.l.b16 %v108
    %v121 = vunpack.c.l.b16 %v109
    %v122 = vunpack.c.l.b16 %v110
    %v123 = vunpack.c.l.b16 %v111
    %v124 = vpack.c.b16 %v121, %v120
    %v125 = vpack.c.b16 %v123, %v122
    %vm128 = vcmask 261120
    %v130 = vsel %vm128, %v107, 0
    %132 = vmatpush.bf16.msra.mxu0 0
    %133 = vmatpush.bf16.msra.mxu0 0
    %134 = vmatpush.bf16.msra.mxu0 0
    %135 = vmatpush.bf16.msra.mxu0 0
    %136 = vmatpush.bf16.msra.mxu0 0
    %137 = vmatpush.bf16.msra.mxu0 0
    %138 = vmatpush.bf16.msra.mxu0 %v125
    %139 = vmatpush.bf16.msra.mxu0 %v124
    %140 = vmatmul.bf16.gmra.mxu0 %v130
    %v141 = vpop.f32.mrf.mxu0
    %v142 = vadd.f32 %v114, %v141
    %v143 = vpop.f32.mrf.mxu0
    %v144 = vadd.f32 %v114, %v143
    %145 = vdwg.mxu0
    %v146 = vld [vmem:[%s3] sm:$0xf]
    %v147 = vld [vmem:[%s3 + $0x4] sm:$0xf]
    %v148 = vld [vmem:[%s3 + $0x8] sm:$0xf]
    %v149 = vld [vmem:[%s3 + $0xc] sm:$0xf]
    %v150 = vld [vmem:[%s4] sm:$0x1]
    %v152 = vperm.slane %v150, 0
    %v158 = vunpack.c.l.b16 %v146
    %v159 = vunpack.c.l.b16 %v147
    %v160 = vunpack.c.l.b16 %v148
    %v161 = vunpack.c.l.b16 %v149
    %v162 = vpack.c.b16 %v159, %v158
    %v163 = vpack.c.b16 %v161, %v160
    %166 = vmatpush.bf16.msra.mxu0 0
    %167 = vmatpush.bf16.msra.mxu0 0
    %168 = vmatpush.bf16.msra.mxu0 0
    %169 = vmatpush.bf16.msra.mxu0 0
    %170 = vmatpush.bf16.msra.mxu0 0
    %171 = vmatpush.bf16.msra.mxu0 0
    %172 = vmatpush.bf16.msra.mxu0 %v163
    %173 = vmatpush.bf16.msra.mxu0 %v162
    %174 = vmatmul.bf16.gmra.mxu0 %v130
    %v175 = vpop.f32.mrf.mxu0
    %v176 = vadd.f32 %v152, %v175
    %v177 = vpop.f32.mrf.mxu0
    %v178 = vadd.f32 %v152, %v177
    %179 = vdwg.mxu0
    %v180 = vld [vmem:[#allocation2] sm:$0xf]
    %v181 = vld [vmem:[#allocation2 + $0x4] sm:$0xf]
    %v182 = vld [vmem:[#allocation2 + $0x8] sm:$0xf]
    %v183 = vld [vmem:[#allocation2 + $0xc] sm:$0xf]
    %v184 = vld [vmem:[%s6] sm:$0x1]
    %v186 = vperm.slane %v184, 0
    %v192 = vunpack.c.l.b16 %v180
    %v193 = vunpack.c.l.b16 %v181
    %v194 = vunpack.c.l.b16 %v182
    %v195 = vunpack.c.l.b16 %v183
    %v196 = vpack.c.b16 %v193, %v192
    %v197 = vpack.c.b16 %v195, %v194
    %200 = vmatpush.bf16.msra.mxu0 0
    %201 = vmatpush.bf16.msra.mxu0 0
    %202 = vmatpush.bf16.msra.mxu0 0
    %203 = vmatpush.bf16.msra.mxu0 0
    %204 = vmatpush.bf16.msra.mxu0 0
    %205 = vmatpush.bf16.msra.mxu0 0
    %206 = vmatpush.bf16.msra.mxu0 %v197
    %207 = vmatpush.bf16.msra.mxu0 %v196
    %208 = vmatmul.bf16.gmra.mxu0 %v130
    %v209 = vpop.f32.mrf.mxu0
    %v210 = vadd.f32 %v186, %v209
    %v211 = vpop.f32.mrf.mxu0
    %v212 = vadd.f32 %v186, %v211
    %213 = vdwg.mxu0
    %v214 = vpack.c.bf16 %v142, %v142
    %v215 = vpack.c.bf16 %v144, %v144
    %v216 = vpack.c.bf16 %v176, %v176
    %v217 = vpack.c.bf16 %v178, %v178
    %v218 = vpack.c.bf16 %v210, %v210
    %v219 = vpack.c.bf16 %v212, %v212
    %vm220 = vcmask 64512
    %v222 = vsel %vm220, %v214, 0
    %v225 = vsel %vm220, %v216, 0
    %227 = vmatpush.bf16.xpose.msra.mxu0 0
    %228 = vmatpush.bf16.xpose.msra.mxu0 0
    %229 = vmatpush.bf16.xpose.msra.mxu0 0
    %230 = vmatpush.bf16.xpose.msra.mxu0 0
    %231 = vmatpush.bf16.xpose.msra.mxu0 0
    %232 = vmatpush.bf16.xpose.msra.mxu0 0
    %233 = vmatpush.bf16.xpose.msra.mxu0 0
    %234 = vmatpush.bf16.xpose.msra.mxu0 %v225
    %235 = vmatmul.bf16.gmra.mxu0 %v222
    %v236 = vpop.f32.mrf.mxu0
    %v237 = vadd.f32 0.0, %v236
    %v238 = vpop.f32.mrf.mxu0
    %239 = vdwg.mxu0
    %v241 = vsel %vm220, %v215, 0
    %v244 = vsel %vm220, %v217, 0
    %246 = vmatpush.bf16.xpose.msra.mxu0 0
    %247 = vmatpush.bf16.xpose.msra.mxu0 0
    %248 = vmatpush.bf16.xpose.msra.mxu0 0
    %249 = vmatpush.bf16.xpose.msra.mxu0 0
    %250 = vmatpush.bf16.xpose.msra.mxu0 0
    %251 = vmatpush.bf16.xpose.msra.mxu0 0
    %252 = vmatpush.bf16.xpose.msra.mxu0 0
    %253 = vmatpush.bf16.xpose.msra.mxu0 %v244
    %254 = vmatmul.bf16.gmra.mxu0 %v241
    %v255 = vpop.f32.mrf.mxu0
    %v256 = vadd.f32 0.0, %v255
    %v257 = vpop.f32.mrf.mxu0
    %258 = vdwg.mxu0
    %v259 = vsel %vm220, %v237, -inf
    %260 = vmax.xlane.f32.xlu0 %v259
    %v261 = vpop.xlane.xlu0 %260
    %v262 = vsel %vm220, %v256, -inf
    %263 = vmax.xlane.f32.xlu0 %v262
    %v264 = vpop.xlane.xlu0 %263
    %v265 = vsub.f32 %v237, %v261
    %v266 = vsub.f32 %v256, %v264
    %v267 = vmul.f32 %v265, 1.442695
    %v268 = vpow.pop %v267
    %v269 = vmul.f32 %v266, 1.442695
    %v270 = vpow.pop %v269
    %v271 = vsel %vm220, %v268, 0.0
    %272 = vadd.xlane.f32.xlu0 %v271
    %v273 = vpop.xlane.xlu0 %272
    %v274 = vsel %vm220, %v270, 0.0
    %275 = vadd.xlane.f32.xlu0 %v274
    %v276 = vpop.xlane.xlu0 %275
    %v277 = vrcp.pop %v273
    %v278 = vrcp.pop %v276
    %v279 = vmul.f32 %v268, %v277
    %v280 = vmul.f32 %v270, %v278
    %v281 = vpack.c.bf16 %v279, %v279
    %v282 = vpack.c.bf16 %v280, %v280
    %v284 = vsel %vm220, %v281, 0
    %vm286 = vcmask 1043456
    %v288 = vsel %vm286, %v218, 0
    %290 = vmatpush.bf16.msra.mxu0 0
    %291 = vmatpush.bf16.msra.mxu0 0
    %292 = vmatpush.bf16.msra.mxu0 0
    %293 = vmatpush.bf16.msra.mxu0 0
    %294 = vmatpush.bf16.msra.mxu0 0
    %295 = vmatpush.bf16.msra.mxu0 0
    %296 = vmatpush.bf16.msra.mxu0 0
    %297 = vmatpush.bf16.msra.mxu0 %v288
    %298 = vmatmul.bf16.gmra.mxu0 %v284
    %v299 = vpop.f32.mrf.mxu0
    %v300 = vadd.f32 0.0, %v299
    %v301 = vpop.f32.mrf.mxu0
    %302 = vdwg.mxu0
    %v304 = vsel %vm220, %v282, 0
    %v307 = vsel %vm286, %v219, 0
    %309 = vmatpush.bf16.msra.mxu0 0
    %310 = vmatpush.bf16.msra.mxu0 0
    %311 = vmatpush.bf16.msra.mxu0 0
    %312 = vmatpush.bf16.msra.mxu0 0
    %313 = vmatpush.bf16.msra.mxu0 0
    %314 = vmatpush.bf16.msra.mxu0 0
    %315 = vmatpush.bf16.msra.mxu0 0
    %316 = vmatpush.bf16.msra.mxu0 %v307
    %317 = vmatmul.bf16.gmra.mxu0 %v304
    %v318 = vpop.f32.mrf.mxu0
    %v319 = vadd.f32 0.0, %v318
    %v320 = vpop.f32.mrf.mxu0
    %321 = vdwg.mxu0
    %v322 = vpack.c.bf16 %v319, %v300
    %v323 = vld [vmem:[#allocation5] sm:$0xf]
    %v325 = vunpack.c.l.b16 %v214
    %v326 = vpack.c.b16 %v325, %v325
    %327 = vrot.lane.b32.xlu0 %v326, 120
    %v328 = vpop.permute.xlu0 %327
    %v330 = vunpack.c.l.b16 %v216
    %v331 = vpack.c.b16 %v330, %v330
    %332 = vrot.lane.b32.xlu0 %v331, 120
    %v333 = vpop.permute.xlu0 %332
    %v335 = vsel %vm220, %v328, 0
    %v338 = vsel %vm220, %v333, 0
    %340 = vmatpush.bf16.xpose.msra.mxu0 0
    %341 = vmatpush.bf16.xpose.msra.mxu0 0
    %342 = vmatpush.bf16.xpose.msra.mxu0 0
    %343 = vmatpush.bf16.xpose.msra.mxu0 0
    %344 = vmatpush.bf16.xpose.msra.mxu0 0
    %345 = vmatpush.bf16.xpose.msra.mxu0 0
    %346 = vmatpush.bf16.xpose.msra.mxu0 0
    %347 = vmatpush.bf16.xpose.msra.mxu0 %v338
    %348 = vmatmul.bf16.gmra.mxu0 %v335
    %v349 = vpop.f32.mrf.mxu0
    %v350 = vadd.f32 0.0, %v349
    %v351 = vpop.f32.mrf.mxu0
    %352 = vdwg.mxu0
    %v354 = vunpack.c.l.b16 %v215
    %v355 = vpack.c.b16 %v354, %v354
    %356 = vrot.lane.b32.xlu0 %v355, 120
    %v357 = vpop.permute.xlu0 %356
    %v359 = vunpack.c.l.b16 %v217
    %v360 = vpack.c.b16 %v359, %v359
    %361 = vrot.lane.b32.xlu0 %v360, 120
    %v362 = vpop.permute.xlu0 %361
    %v364 = vsel %vm220, %v357, 0
    %v367 = vsel %vm220, %v362, 0
    %369 = vmatpush.bf16.xpose.msra.mxu0 0
    %370 = vmatpush.bf16.xpose.msra.mxu0 0
    %371 = vmatpush.bf16.xpose.msra.mxu0 0
    %372 = vmatpush.bf16.xpose.msra.mxu0 0
    %373 = vmatpush.bf16.xpose.msra.mxu0 0
    %374 = vmatpush.bf16.xpose.msra.mxu0 0
    %375 = vmatpush.bf16.xpose.msra.mxu0 0
    %376 = vmatpush.bf16.xpose.msra.mxu0 %v367
    %377 = vmatmul.bf16.gmra.mxu0 %v364
    %v378 = vpop.f32.mrf.mxu0
    %v379 = vadd.f32 0.0, %v378
    %v380 = vpop.f32.mrf.mxu0
    %381 = vdwg.mxu0
    %v382 = vsel %vm220, %v350, -inf
    %383 = vmax.xlane.f32.xlu0 %v382
    %v384 = vpop.xlane.xlu0 %383
    %v385 = vsel %vm220, %v379, -inf
    %386 = vmax.xlane.f32.xlu0 %v385
    %v387 = vpop.xlane.xlu0 %386
    %v388 = vsub.f32 %v350, %v384
    %v389 = vsub.f32 %v379, %v387
    %v390 = vmul.f32 %v388, 1.442695
    %v391 = vpow.pop %v390
    %v392 = vmul.f32 %v389, 1.442695
    %v393 = vpow.pop %v392
    %v394 = vsel %vm220, %v391, 0.0
    %395 = vadd.xlane.f32.xlu0 %v394
    %v396 = vpop.xlane.xlu0 %395
    %v397 = vsel %vm220, %v393, 0.0
    %398 = vadd.xlane.f32.xlu0 %v397
    %v399 = vpop.xlane.xlu0 %398
    %v400 = vrcp.pop %v396
    %v401 = vrcp.pop %v399
    %v402 = vmul.f32 %v391, %v400
    %v403 = vmul.f32 %v393, %v401
    %v404 = vpack.c.bf16 %v402, %v402
    %v405 = vpack.c.bf16 %v403, %v403
    %v407 = vunpack.c.l.b16 %v218
    %v408 = vpack.c.b16 %v407, %v407
    %409 = vrot.lane.b32.xlu0 %v408, 120
    %v410 = vpop.permute.xlu0 %409
    %v412 = vsel %vm220, %v404, 0
    %v415 = vsel %vm286, %v410, 0
    %417 = vmatpush.bf16.msra.mxu0 0
    %418 = vmatpush.bf16.msra.mxu0 0
    %419 = vmatpush.bf16.msra.mxu0 0
    %420 = vmatpush.bf16.msra.mxu0 0
    %421 = vmatpush.bf16.msra.mxu0 0
    %422 = vmatpush.bf16.msra.mxu0 0
    %423 = vmatpush.bf16.msra.mxu0 0
    %424 = vmatpush.bf16.msra.mxu0 %v415
    %425 = vmatmul.bf16.gmra.mxu0 %v412
    %v426 = vpop.f32.mrf.mxu0
    %v427 = vadd.f32 0.0, %v426
    %v428 = vpop.f32.mrf.mxu0
    %429 = vdwg.mxu0
    %v431 = vunpack.c.l.b16 %v219
    %v432 = vpack.c.b16 %v431, %v431
    %433 = vrot.lane.b32.xlu0 %v432, 120
    %v434 = vpop.permute.xlu0 %433
    %v436 = vsel %vm220, %v405, 0
    %v439 = vsel %vm286, %v434, 0
    %441 = vmatpush.bf16.msra.mxu0 0
    %442 = vmatpush.bf16.msra.mxu0 0
    %443 = vmatpush.bf16.msra.mxu0 0
    %444 = vmatpush.bf16.msra.mxu0 0
    %445 = vmatpush.bf16.msra.mxu0 0
    %446 = vmatpush.bf16.msra.mxu0 0
    %447 = vmatpush.bf16.msra.mxu0 0
    %448 = vmatpush.bf16.msra.mxu0 %v439
    %449 = vmatmul.bf16.gmra.mxu0 %v436
    %v450 = vpop.f32.mrf.mxu0
    %v451 = vadd.f32 0.0, %v450
    %v452 = vpop.f32.mrf.mxu0
    %453 = vdwg.mxu0
    %v454 = vpack.c.bf16 %v451, %v427
    %s455 = scalar_lea.vmem [#allocation5], 4
    %v456 = vld [vmem:[%s455] sm:$0xf]
    %v458 = vsel %vm220, %v454, 0
    %v461 = vsel %vm286, %v456, 0
    %463 = vmatpush.bf16.msra.mxu0 0
    %464 = vmatpush.bf16.msra.mxu0 0
    %465 = vmatpush.bf16.msra.mxu0 0
    %466 = vmatpush.bf16.msra.mxu0 0
    %467 = vmatpush.bf16.msra.mxu0 0
    %468 = vmatpush.bf16.msra.mxu0 0
    %469 = vmatpush.bf16.msra.mxu0 0
    %470 = vmatpush.bf16.msra.mxu0 %v461
    %471 = vmatmul.bf16.gmra.mxu0 %v458
    %v472 = vpop.f32.mrf.mxu0
    %v473 = vadd.f32 0.0, %v472
    %v474 = vpop.f32.mrf.mxu0
    %v475 = vadd.f32 0.0, %v474
    %476 = vdwg.mxu0
    %v478 = vsel %vm220, %v322, 0
    %v481 = vsel %vm286, %v323, 0
    %483 = vmatpush.bf16.msra.mxu0 0
    %484 = vmatpush.bf16.msra.mxu0 0
    %485 = vmatpush.bf16.msra.mxu0 0
    %486 = vmatpush.bf16.msra.mxu0 0
    %487 = vmatpush.bf16.msra.mxu0 0
    %488 = vmatpush.bf16.msra.mxu0 0
    %489 = vmatpush.bf16.msra.mxu0 0
    %490 = vmatpush.bf16.msra.mxu0 %v481
    %491 = vmatmul.bf16.gmra.mxu0 %v478
    %v492 = vpop.f32.mrf.mxu0
    %v493 = vadd.f32 %v473, %v492
    %v494 = vpop.f32.mrf.mxu0
    %v495 = vadd.f32 %v475, %v494
    %496 = vdwg.mxu0
    %497 = vrot.lane.b32.xlu0 %v326, 112
    %v498 = vpop.permute.xlu0 %497
    %499 = vrot.lane.b32.xlu0 %v331, 112
    %v500 = vpop.permute.xlu0 %499
    %v502 = vsel %vm220, %v498, 0
    %v505 = vsel %vm220, %v500, 0
    %507 = vmatpush.bf16.xpose.msra.mxu0 0
    %508 = vmatpush.bf16.xpose.msra.mxu0 0
    %509 = vmatpush.bf16.xpose.msra.mxu0 0
    %510 = vmatpush.bf16.xpose.msra.mxu0 0
    %511 = vmatpush.bf16.xpose.msra.mxu0 0
    %512 = vmatpush.bf16.xpose.msra.mxu0 0
    %513 = vmatpush.bf16.xpose.msra.mxu0 0
    %514 = vmatpush.bf16.xpose.msra.mxu0 %v505
    %515 = vmatmul.bf16.gmra.mxu0 %v502
    %v516 = vpop.f32.mrf.mxu0
    %v517 = vadd.f32 0.0, %v516
    %v518 = vpop.f32.mrf.mxu0
    %519 = vdwg.mxu0
    %520 = vrot.lane.b32.xlu0 %v355, 112
    %v521 = vpop.permute.xlu0 %520
    %522 = vrot.lane.b32.xlu0 %v360, 112
    %v523 = vpop.permute.xlu0 %522
    %v525 = vsel %vm220, %v521, 0
    %v528 = vsel %vm220, %v523, 0
    %530 = vmatpush.bf16.xpose.msra.mxu0 0
    %531 = vmatpush.bf16.xpose.msra.mxu0 0
    %532 = vmatpush.bf16.xpose.msra.mxu0 0
    %533 = vmatpush.bf16.xpose.msra.mxu0 0
    %534 = vmatpush.bf16.xpose.msra.mxu0 0
    %535 = vmatpush.bf16.xpose.msra.mxu0 0
    %536 = vmatpush.bf16.xpose.msra.mxu0 0
    %537 = vmatpush.bf16.xpose.msra.mxu0 %v528
    %538 = vmatmul.bf16.gmra.mxu0 %v525
    %v539 = vpop.f32.mrf.mxu0
    %v540 = vadd.f32 0.0, %v539
    %v541 = vpop.f32.mrf.mxu0
    %542 = vdwg.mxu0
    %v543 = vsel %vm220, %v517, -inf
    %544 = vmax.xlane.f32.xlu0 %v543
    %v545 = vpop.xlane.xlu0 %544
    %v546 = vsel %vm220, %v540, -inf
    %547 = vmax.xlane.f32.xlu0 %v546
    %v548 = vpop.xlane.xlu0 %547
    %v549 = vsub.f32 %v517, %v545
    %v550 = vsub.f32 %v540, %v548
    %v551 = vmul.f32 %v549, 1.442695
    %v552 = vpow.pop %v551
    %v553 = vmul.f32 %v550, 1.442695
    %v554 = vpow.pop %v553
    %v555 = vsel %vm220, %v552, 0.0
    %556 = vadd.xlane.f32.xlu0 %v555
    %v557 = vpop.xlane.xlu0 %556
    %v558 = vsel %vm220, %v554, 0.0
    %559 = vadd.xlane.f32.xlu0 %v558
    %v560 = vpop.xlane.xlu0 %559
    %v561 = vrcp.pop %v557
    %v562 = vrcp.pop %v560
    %v563 = vmul.f32 %v552, %v561
    %v564 = vmul.f32 %v554, %v562
    %v565 = vpack.c.bf16 %v563, %v563
    %v566 = vpack.c.bf16 %v564, %v564
    %567 = vrot.lane.b32.xlu0 %v408, 112
    %v568 = vpop.permute.xlu0 %567
    %v570 = vsel %vm220, %v565, 0
    %v573 = vsel %vm286, %v568, 0
    %575 = vmatpush.bf16.msra.mxu0 0
    %576 = vmatpush.bf16.msra.mxu0 0
    %577 = vmatpush.bf16.msra.mxu0 0
    %578 = vmatpush.bf16.msra.mxu0 0
    %579 = vmatpush.bf16.msra.mxu0 0
    %580 = vmatpush.bf16.msra.mxu0 0
    %581 = vmatpush.bf16.msra.mxu0 0
    %582 = vmatpush.bf16.msra.mxu0 %v573
    %583 = vmatmul.bf16.gmra.mxu0 %v570
    %v584 = vpop.f32.mrf.mxu0
    %v585 = vadd.f32 0.0, %v584
    %v586 = vpop.f32.mrf.mxu0
    %587 = vdwg.mxu0
    %588 = vrot.lane.b32.xlu0 %v432, 112
    %v589 = vpop.permute.xlu0 %588
    %v591 = vsel %vm220, %v566, 0
    %v594 = vsel %vm286, %v589, 0
    %596 = vmatpush.bf16.msra.mxu0 0
    %597 = vmatpush.bf16.msra.mxu0 0
    %598 = vmatpush.bf16.msra.mxu0 0
    %599 = vmatpush.bf16.msra.mxu0 0
    %600 = vmatpush.bf16.msra.mxu0 0
    %601 = vmatpush.bf16.msra.mxu0 0
    %602 = vmatpush.bf16.msra.mxu0 0
    %603 = vmatpush.bf16.msra.mxu0 %v594
    %604 = vmatmul.bf16.gmra.mxu0 %v591
    %v605 = vpop.f32.mrf.mxu0
    %v606 = vadd.f32 0.0, %v605
    %v607 = vpop.f32.mrf.mxu0
    %608 = vdwg.mxu0
    %v609 = vpack.c.bf16 %v606, %v585
    %s610 = scalar_lea.vmem [#allocation5], 8
    %v611 = vld [vmem:[%s610] sm:$0xf]
    %v613 = vsel %vm220, %v609, 0
    %v616 = vsel %vm286, %v611, 0
    %618 = vmatpush.bf16.msra.mxu0 0
    %619 = vmatpush.bf16.msra.mxu0 0
    %620 = vmatpush.bf16.msra.mxu0 0
    %621 = vmatpush.bf16.msra.mxu0 0
    %622 = vmatpush.bf16.msra.mxu0 0
    %623 = vmatpush.bf16.msra.mxu0 0
    %624 = vmatpush.bf16.msra.mxu0 0
    %625 = vmatpush.bf16.msra.mxu0 %v616
    %626 = vmatmul.bf16.gmra.mxu0 %v613
    %v627 = vpop.f32.mrf.mxu0
    %v628 = vadd.f32 0.0, %v627
    %v629 = vpop.f32.mrf.mxu0
    %v630 = vadd.f32 0.0, %v629
    %631 = vdwg.mxu0
    %v632 = vadd.f32 %v493, %v628
    %v633 = vadd.f32 %v495, %v630
    %634 = vrot.lane.b32.xlu0 %v326, 104
    %v635 = vpop.permute.xlu0 %634
    %636 = vrot.lane.b32.xlu0 %v331, 104
    %v637 = vpop.permute.xlu0 %636
    %v639 = vsel %vm220, %v635, 0
    %v642 = vsel %vm220, %v637, 0
    %644 = vmatpush.bf16.xpose.msra.mxu0 0
    %645 = vmatpush.bf16.xpose.msra.mxu0 0
    %646 = vmatpush.bf16.xpose.msra.mxu0 0
    %647 = vmatpush.bf16.xpose.msra.mxu0 0
    %648 = vmatpush.bf16.xpose.msra.mxu0 0
    %649 = vmatpush.bf16.xpose.msra.mxu0 0
    %650 = vmatpush.bf16.xpose.msra.mxu0 0
    %651 = vmatpush.bf16.xpose.msra.mxu0 %v642
    %652 = vmatmul.bf16.gmra.mxu0 %v639
    %v653 = vpop.f32.mrf.mxu0
    %v654 = vadd.f32 0.0, %v653
    %v655 = vpop.f32.mrf.mxu0
    %656 = vdwg.mxu0
    %657 = vrot.lane.b32.xlu0 %v355, 104
    %v658 = vpop.permute.xlu0 %657
    %659 = vrot.lane.b32.xlu0 %v360, 104
    %v660 = vpop.permute.xlu0 %659
    %v662 = vsel %vm220, %v658, 0
    %v665 = vsel %vm220, %v660, 0
    %667 = vmatpush.bf16.xpose.msra.mxu0 0
    %668 = vmatpush.bf16.xpose.msra.mxu0 0
    %669 = vmatpush.bf16.xpose.msra.mxu0 0
    %670 = vmatpush.bf16.xpose.msra.mxu0 0
    %671 = vmatpush.bf16.xpose.msra.mxu0 0
    %672 = vmatpush.bf16.xpose.msra.mxu0 0
    %673 = vmatpush.bf16.xpose.msra.mxu0 0
    %674 = vmatpush.bf16.xpose.msra.mxu0 %v665
    %675 = vmatmul.bf16.gmra.mxu0 %v662
    %v676 = vpop.f32.mrf.mxu0
    %v677 = vadd.f32 0.0, %v676
    %v678 = vpop.f32.mrf.mxu0
    %679 = vdwg.mxu0
    %v680 = vsel %vm220, %v654, -inf
    %681 = vmax.xlane.f32.xlu0 %v680
    %v682 = vpop.xlane.xlu0 %681
    %v683 = vsel %vm220, %v677, -inf
    %684 = vmax.xlane.f32.xlu0 %v683
    %v685 = vpop.xlane.xlu0 %684
    %v686 = vsub.f32 %v654, %v682
    %v687 = vsub.f32 %v677, %v685
    %v688 = vmul.f32 %v686, 1.442695
    %v689 = vpow.pop %v688
    %v690 = vmul.f32 %v687, 1.442695
    %v691 = vpow.pop %v690
    %v692 = vsel %vm220, %v689, 0.0
    %693 = vadd.xlane.f32.xlu0 %v692
    %v694 = vpop.xlane.xlu0 %693
    %v695 = vsel %vm220, %v691, 0.0
    %696 = vadd.xlane.f32.xlu0 %v695
    %v697 = vpop.xlane.xlu0 %696
    %v698 = vrcp.pop %v694
    %v699 = vrcp.pop %v697
    %v700 = vmul.f32 %v689, %v698
    %v701 = vmul.f32 %v691, %v699
    %v702 = vpack.c.bf16 %v700, %v700
    %v703 = vpack.c.bf16 %v701, %v701
    %704 = vrot.lane.b32.xlu0 %v408, 104
    %v705 = vpop.permute.xlu0 %704
    %v707 = vsel %vm220, %v702, 0
    %v710 = vsel %vm286, %v705, 0
    %712 = vmatpush.bf16.msra.mxu0 0
    %713 = vmatpush.bf16.msra.mxu0 0
    %714 = vmatpush.bf16.msra.mxu0 0
    %715 = vmatpush.bf16.msra.mxu0 0
    %716 = vmatpush.bf16.msra.mxu0 0
    %717 = vmatpush.bf16.msra.mxu0 0
    %718 = vmatpush.bf16.msra.mxu0 0
    %719 = vmatpush.bf16.msra.mxu0 %v710
    %720 = vmatmul.bf16.gmra.mxu0 %v707
    %v721 = vpop.f32.mrf.mxu0
    %v722 = vadd.f32 0.0, %v721
    %v723 = vpop.f32.mrf.mxu0
    %724 = vdwg.mxu0
    %725 = vrot.lane.b32.xlu0 %v432, 104
    %v726 = vpop.permute.xlu0 %725
    %v728 = vsel %vm220, %v703, 0
    %v731 = vsel %vm286, %v726, 0
    %733 = vmatpush.bf16.msra.mxu0 0
    %734 = vmatpush.bf16.msra.mxu0 0
    %735 = vmatpush.bf16.msra.mxu0 0
    %736 = vmatpush.bf16.msra.mxu0 0
    %737 = vmatpush.bf16.msra.mxu0 0
    %738 = vmatpush.bf16.msra.mxu0 0
    %739 = vmatpush.bf16.msra.mxu0 0
    %740 = vmatpush.bf16.msra.mxu0 %v731
    %741 = vmatmul.bf16.gmra.mxu0 %v728
    %v742 = vpop.f32.mrf.mxu0
    %v743 = vadd.f32 0.0, %v742
    %v744 = vpop.f32.mrf.mxu0
    %745 = vdwg.mxu0
    %v746 = vpack.c.bf16 %v743, %v722
    %s747 = scalar_lea.vmem [#allocation5], 12
    %v748 = vld [vmem:[%s747] sm:$0xf]
    %v750 = vsel %vm220, %v746, 0
    %v753 = vsel %vm286, %v748, 0
    %755 = vmatpush.bf16.msra.mxu0 0
    %756 = vmatpush.bf16.msra.mxu0 0
    %757 = vmatpush.bf16.msra.mxu0 0
    %758 = vmatpush.bf16.msra.mxu0 0
    %759 = vmatpush.bf16.msra.mxu0 0
    %760 = vmatpush.bf16.msra.mxu0 0
    %761 = vmatpush.bf16.msra.mxu0 0
    %762 = vmatpush.bf16.msra.mxu0 %v753
    %763 = vmatmul.bf16.gmra.mxu0 %v750
    %v764 = vpop.f32.mrf.mxu0
    %v765 = vadd.f32 0.0, %v764
    %v766 = vpop.f32.mrf.mxu0
    %v767 = vadd.f32 0.0, %v766
    %768 = vdwg.mxu0
    %v769 = vadd.f32 %v632, %v765
    %v770 = vadd.f32 %v633, %v767
    %v771 = vld [vmem:[%s8] sm:$0x1]
    %v773 = vperm.slane %v771, 0
    %v775 = vadd.f32 %v769, %v773
    %v776 = vadd.f32 %v770, %v773
    %v777 = vadd.f32 %v105, %v775
    %v778 = vadd.f32 %v106, %v776
    %v779 = vsel %vm128, %v777, 0.0
    %v780 = vsel %vm128, %v778, 0.0
    %v781 = vadd.f32 %v779, %v780
    %v782 = vrot.slane %v781, 4
    %v783 = vadd.f32 %v781, %v782
    %v784 = vrot.slane %v783, 2
    %v785 = vadd.f32 %v783, %v784
    %v786 = vrot.slane %v785, 1
    %v787 = vadd.f32 %v785, %v786
    %v788 = vrcp.pop 16.0
    %v789 = vmul.f32 16.0, %v788
    %v790 = vsub.f32 1.0, %v789
    %v791 = vmul.f32 %v788, %v790
    %v792 = vadd.f32 %v788, %v791
    %vm793 = vweird.f32 %v788
    %v794 = vsel %vm793, %v788, %v792
    %v795 = vmul.f32 %v787, %v794
    %v796 = vsub.f32 %v777, %v795
    %v797 = vsub.f32 %v778, %v795
    %v798 = vmul.f32 %v796, %v796
    %v799 = vmul.f32 %v797, %v797
    %v800 = vsel %vm128, %v798, 0.0
    %v801 = vsel %vm128, %v799, 0.0
    %v802 = vadd.f32 %v800, %v801
    %v803 = vrot.slane %v802, 4
    %v804 = vadd.f32 %v802, %v803
    %v805 = vrot.slane %v804, 2
    %v806 = vadd.f32 %v804, %v805
    %v807 = vrot.slane %v806, 1
    %v808 = vadd.f32 %v806, %v807
    %v809 = vmul.f32 %v808, %v794
    %v810 = vadd.f32 %v809, 1e-05
    %v811 = vrsqrt.pop %v810
    %v812 = vmul.f32 %v811, %v810
    %v813 = vmul.f32 %v812, %v811
    %v814 = vmul.f32 0.5, %v813
    %v815 = vsub.f32 1.5, %v814
    %v816 = vmul.f32 %v811, %v815
    %vm817 = vweird.f32 %v810
    %vm818 = vweird.f32 %v811
    %vm819 = vmor %vm817, %vm818
    %v820 = vsel %vm819, %v811, %v816
    %v821 = vmul.f32 %v796, %v820
    %v822 = vmul.f32 %v797, %v820
    %v823 = vld [vmem:[%s9] sm:$0x1]
    %v825 = vperm.slane %v823, 0
    %v827 = vmul.f32 %v821, %v825
    %v828 = vmul.f32 %v822, %v825
    %v829 = vld [vmem:[%s10] sm:$0x1]
    %v831 = vperm.slane %v829, 0
    %v833 = vadd.f32 %v827, %v831
    %v834 = vadd.f32 %v828, %v831
    %v835 = vpack.c.bf16 %v834, %v833
    %v836 = vld [vmem:[#allocation7] sm:$0xf]
    %v837 = vld [vmem:[#allocation7 + $0x4] sm:$0xf]
    %v838 = vld [vmem:[#allocation7 + $0x8] sm:$0xf]
    %v839 = vld [vmem:[#allocation7 + $0xc] sm:$0xf]
    %v840 = vld [vmem:[%s12] sm:$0x1]
    %v842 = vperm.slane %v840, 0
    %v848 = vunpack.c.l.b16 %v836
    %v849 = vunpack.c.l.b16 %v837
    %v850 = vunpack.c.l.b16 %v838
    %v851 = vunpack.c.l.b16 %v839
    %v852 = vpack.c.b16 %v849, %v848
    %v853 = vpack.c.b16 %v851, %v850
    %v857 = vsel %vm128, %v835, 0
    %859 = vmatpush.bf16.msra.mxu0 0
    %860 = vmatpush.bf16.msra.mxu0 0
    %861 = vmatpush.bf16.msra.mxu0 0
    %862 = vmatpush.bf16.msra.mxu0 0
    %863 = vmatpush.bf16.msra.mxu0 0
    %864 = vmatpush.bf16.msra.mxu0 0
    %865 = vmatpush.bf16.msra.mxu0 %v853
    %866 = vmatpush.bf16.msra.mxu0 %v852
    %867 = vmatmul.bf16.gmra.mxu0 %v857
    %v868 = vpop.f32.mrf.mxu0
    %v869 = vadd.f32 %v842, %v868
    %v870 = vpop.f32.mrf.mxu0
    %v871 = vadd.f32 %v842, %v870
    %872 = vdwg.mxu0
    %v873 = vmul.f32 %v869, 0.5
    %v874 = vmul.f32 %v871, 0.5
    %v875 = vmul.f32 %v869, 0.044715
    %v876 = vmul.f32 %v871, 0.044715
    %v877 = vmul.f32 %v875, %v869
    %v878 = vmul.f32 %v876, %v871
    %v879 = vmul.f32 %v877, %v869
    %v880 = vmul.f32 %v878, %v871
    %v881 = vadd.f32 %v869, %v879
    %v882 = vadd.f32 %v871, %v880
    %v883 = vmul.f32 %v881, 0.7978846
    %v884 = vmul.f32 %v882, 0.7978846
    %v885 = vtanh.pop %v883
    %v886 = vtanh.pop %v884
    %v887 = vadd.f32 %v885, 1.0
    %v888 = vadd.f32 %v886, 1.0
    %v889 = vmul.f32 %v873, %v887
    %v890 = vmul.f32 %v874, %v888
    %v891 = vpack.c.bf16 %v890, %v889
    %v892 = vld [vmem:[%s13] sm:$0xf]
    %v893 = vld [vmem:[%s13 + $0x4] sm:$0xf]
    %v894 = vld [vmem:[%s13 + $0x8] sm:$0xf]
    %v895 = vld [vmem:[%s13 + $0xc] sm:$0xf]
    %v896 = vld [vmem:[%s13 + $0x10] sm:$0xf]
    %v897 = vld [vmem:[%s13 + $0x14] sm:$0xf]
    %v898 = vld [vmem:[%s13 + $0x18] sm:$0xf]
    %v899 = vld [vmem:[%s13 + $0x1c] sm:$0xf]
    %v900 = vld [vmem:[%s14] sm:$0x1]
    %v902 = vperm.slane %v900, 0
    %v912 = vunpack.c.l.b16 %v892
    %v913 = vunpack.c.l.b16 %v893
    %v914 = vunpack.c.l.b16 %v894
    %v915 = vunpack.c.l.b16 %v895
    %v916 = vunpack.c.l.b16 %v896
    %v917 = vunpack.c.l.b16 %v897
    %v918 = vunpack.c.l.b16 %v898
    %v919 = vunpack.c.l.b16 %v899
    %v920 = vpack.c.b16 %v913, %v912
    %v921 = vpack.c.b16 %v915, %v914
    %v922 = vpack.c.b16 %v917, %v916
    %v923 = vpack.c.b16 %v919, %v918
    %vm928 = vcmask 523264
    %v930 = vsel %vm928, %v891, 0
    %932 = vmatpush.bf16.msra.mxu0 0
    %933 = vmatpush.bf16.msra.mxu0 0
    %934 = vmatpush.bf16.msra.mxu0 0
    %935 = vmatpush.bf16.msra.mxu0 0
    %936 = vmatpush.bf16.msra.mxu0 %v923
    %937 = vmatpush.bf16.msra.mxu0 %v922
    %938 = vmatpush.bf16.msra.mxu0 %v921
    %939 = vmatpush.bf16.msra.mxu0 %v920
    %940 = vmatmul.bf16.gmra.mxu0 %v930
    %v941 = vpop.f32.mrf.mxu0
    %v942 = vadd.f32 %v902, %v941
    %v943 = vpop.f32.mrf.mxu0
    %v944 = vadd.f32 %v902, %v943
    %945 = vdwg.mxu0
    %v946 = vadd.f32 %v833, %v942
    %v947 = vadd.f32 %v834, %v944
    %v948 = vsel %vm128, %v946, 0.0
    %v949 = vsel %vm128, %v947, 0.0
    %v950 = vadd.f32 %v948, %v949
    %v951 = vrot.slane %v950, 4
    %v952 = vadd.f32 %v950, %v951
    %v953 = vrot.slane %v952, 2
    %v954 = vadd.f32 %v952, %v953
    %v955 = vrot.slane %v954, 1
    %v956 = vadd.f32 %v954, %v955
    %v957 = vmul.f32 %v956, %v794
    %v958 = vsub.f32 %v946, %v957
    %v959 = vsub.f32 %v947, %v957
    %v960 = vmul.f32 %v958, %v958
    %v961 = vmul.f32 %v959, %v959
    %v962 = vsel %vm128, %v960, 0.0
    %v963 = vsel %vm128, %v961, 0.0
    %v964 = vadd.f32 %v962, %v963
    %v965 = vrot.slane %v964, 4
    %v966 = vadd.f32 %v964, %v965
    %v967 = vrot.slane %v966, 2
    %v968 = vadd.f32 %v966, %v967
    %v969 = vrot.slane %v968, 1
    %v970 = vadd.f32 %v968, %v969
    %v971 = vmul.f32 %v970, %v794
    %v972 = vadd.f32 %v971, 1e-05
    %v973 = vrsqrt.pop %v972
    %v974 = vmul.f32 %v973, %v972
    %v975 = vmul.f32 %v974, %v973
    %v976 = vmul.f32 0.5, %v975
    %v977 = vsub.f32 1.5, %v976
    %v978 = vmul.f32 %v973, %v977
    %vm979 = vweird.f32 %v972
    %vm980 = vweird.f32 %v973
    %vm981 = vmor %vm979, %vm980
    %v982 = vsel %vm981, %v973, %v978
    %v983 = vmul.f32 %v958, %v982
    %v984 = vmul.f32 %v959, %v982
    %v985 = vld [vmem:[%s15] sm:$0x1]
    %v987 = vperm.slane %v985, 0
    %v989 = vmul.f32 %v983, %v987
    %v990 = vmul.f32 %v984, %v987
    %v991 = vld [vmem:[%s16] sm:$0x1]
    %v993 = vperm.slane %v991, 0
    %v995 = vadd.f32 %v989, %v993
    %v996 = vadd.f32 %v990, %v993
    %997 = vst.msk [vmem:[#allocation8] sm:$0xff] %vm128, %v995
    %998 = vst.msk [vmem:[#allocation8 + $0x8] sm:$0xff] %vm128, %v996
    // Predicated region
    $region82: #{tpu_custom_call.1} parent=1 // pred_check
      _
    $region83: #{tpu_custom_call.1} parent=1 // pred_check_branch
      %1000 = sbr.rel (0) target = $region85
    $region84: #{tpu_custom_call.1} parent=1 // pred_region
      %1002 = vsyncadd [#allocation4], 0
      %s1003 = sshll.u32 [#allocation8], 4
      %s1004 = int_to_ptr.vmem [resolvable:$true] %s1003
      %s1005 = sshll.u32 %s17, 4
      %s1006 = int_to_ptr.hbm [resolvable:$true] %s1005
      %1011 = dma.vmem_to_hbm [thread:$0]  %s1004, 256, %s1006, [#allocation4], 128, 128, 8
    $region85: #{tpu_custom_call.1} parent=1 // pred_fallthru
      _
    // Predicated region
    $region86: #{tpu_custom_call.1} parent=1 // pred_check
      _
    $region87: #{tpu_custom_call.1} parent=1 // pred_check_branch
      %1013 = sbr.rel (0) target = $region89
    $region88: #{tpu_custom_call.1} parent=1 // pred_region
      %1015 = dma.done [#allocation4], 256
    $region89: #{tpu_custom_call.1} parent=1 // pred_fallthru
      _
    %1016 = vsyncpa [#allocation3], 1
    %1017 = vsyncpa [#allocation6], 1
    %1018 = vsyncpa [#allocation4], 1

</llo_original>
